<compile_context>
chip_gen: v5e
topology: v5e:2x2
jax: 0.10.0
libtpu: 0.0.40
codegen_flags: <defaults>
</compile_context>

<pallas_src>
import functools

import jax
import jax.numpy as jnp
from jax.experimental import pallas as pl
from jax.experimental.pallas import tpu as pltpu


# ----------------------------------------------------------------------------
# Pallas kernel: embedding gather + input projection + LSTM recurrence + fc,
# all in one invocation.
# ----------------------------------------------------------------------------
def _lstm_fused_kernel(tok_ref,                          # SMEM (B, S) int32 (scalar prefetch)
                       embed_ref, h0_ref, c0_ref,        # VMEM inputs
                       wih_ref, whh_ref, b_ref,
                       wfc_ref, bfc_ref,
                       out_ref, hn_ref, cn_ref,          # VMEM outputs
                       emb_scr, hhist_scr,               # VMEM scratch
                       *, seq_len, batch, hidden, compute_dtype):
    S, B, H = seq_len, batch, hidden
    cd = compute_dtype

    # --- In-kernel embedding gather (time-major rows: r = t*B + b) ----------
    # Token ids are scalars in SMEM; each row is a dynamic-index VMEM load.
    for t in range(S):
        for b in range(B):
            idx = tok_ref[b, t]
            emb_scr[pl.ds(t * B + b, 1), :] = embed_ref[pl.ds(idx, 1), :]

    # --- Batched input projection for ALL timesteps: one MXU matmul ---------
    gx = (jnp.dot(emb_scr[...], wih_ref[...],
                  preferred_element_type=jnp.float32)
          + b_ref[...])                                   # (S*B, 4H) fp32

    whh = whh_ref[...]                                    # (H, 4H), loaded once
    h = h0_ref[...]                                       # (B, H) fp32
    c = c0_ref[...]                                       # (B, H) fp32

    # --- Sequential recurrence: only h @ W_hh on the critical path ----------
    for t in range(S):                                    # static unrolled (S small)
        gates = gx[t * B:(t + 1) * B, :] + jnp.dot(
            h.astype(cd), whh, preferred_element_type=jnp.float32)   # (B, 4H)

        sig = jax.nn.sigmoid(gates)                       # 1 full-width EUP pass
        tnh = jnp.tanh(gates)                             # 1 full-width EUP pass
        i_g = sig[:, 0 * H:1 * H]
        f_g = sig[:, 1 * H:2 * H]
        g_g = tnh[:, 2 * H:3 * H]
        o_g = sig[:, 3 * H:4 * H]

        c = f_g * c + i_g * g_g                           # fp32 elementwise
        h = o_g * jnp.tanh(c)

        # Batch-major history (row = b*S + t) -> final output needs no transpose.
        for b in range(B):
            hhist_scr[pl.ds(b * S + t, 1), :] = h[b:b + 1, :]

    # --- Final states: written exactly once ----------------------------------
    hn_ref[...] = h
    cn_ref[...] = c

    # --- One fc matmul over the batch-major history + one contiguous store ---
    out_ref[...] = (jnp.dot(hhist_scr[...].astype(cd), wfc_ref[...],
                            preferred_element_type=jnp.float32)
                    + bfc_ref[...])                       # (B*S, O)


# ----------------------------------------------------------------------------
# Wrapper
# ----------------------------------------------------------------------------
def simple_lstm_generator_forward(features, hidden_and_cell_state, params,
                                  *, compute_dtype=jnp.float32):
    """features: (batch, seq) int32; hidden_and_cell_state: ((1,B,H), (1,B,H)).

    compute_dtype=jnp.bfloat16 casts the MXU weight operands (wrapper-side) and
    the recurrent activation; this is a numerical deviation from PyTorch fp32.
    Default fp32 preserves PyTorch-equivalent semantics. Gate/state math is
    always fp32.
    """
    h0, c0 = hidden_and_cell_state
    assert h0.shape[0] == 1 and c0.shape[0] == 1, "kernel supports num_layers == 1 only"

    cd = compute_dtype
    # Wrapper-side casts: halves weight DMA bytes and removes per-call in-kernel
    # casts when cd == bf16; no-ops for fp32.
    embed_w = params["embed"].astype(cd)   # (vocab, E)
    wih = params["w_ih"].astype(cd)        # (E, 4H)  (transposed PyTorch weight_ih_l0)
    whh = params["w_hh"].astype(cd)        # (H, 4H)  (transposed PyTorch weight_hh_l0)
    wfc = params["w_fc"].astype(cd)        # (H, O)   (transposed PyTorch fc.weight)
    b = params["b"]                        # (1, 4H)  fp32 (b_ih + b_hh)
    bfc = params["b_fc"]                   # (1, O)   fp32

    B, S = features.shape
    V, E = embed_w.shape
    H = whh.shape[0]
    O = wfc.shape[1]

    kernel = functools.partial(
        _lstm_fused_kernel,
        seq_len=S, batch=B, hidden=H, compute_dtype=cd)

    grid_spec = pltpu.PrefetchScalarGridSpec(
        num_scalar_prefetch=1,                            # token ids -> SMEM
        grid=(1,),                                        # single step: no pipeline overhead
        in_specs=[
            pl.BlockSpec((V, E), lambda i, tok: (0, 0)),        # embedding table
            pl.BlockSpec((B, H), lambda i, tok: (0, 0)),        # h0
            pl.BlockSpec((B, H), lambda i, tok: (0, 0)),        # c0
            pl.BlockSpec((E, 4 * H), lambda i, tok: (0, 0)),    # W_ih
            pl.BlockSpec((H, 4 * H), lambda i, tok: (0, 0)),    # W_hh
            pl.BlockSpec((1, 4 * H), lambda i, tok: (0, 0)),    # bias (b_ih + b_hh)
            pl.BlockSpec((H, O), lambda i, tok: (0, 0)),        # W_fc
            pl.BlockSpec((1, O), lambda i, tok: (0, 0)),        # b_fc
        ],
        out_specs=[
            pl.BlockSpec((B * S, O), lambda i, tok: (0, 0)),    # batch-major logits
            pl.BlockSpec((B, H), lambda i, tok: (0, 0)),        # h_n
            pl.BlockSpec((B, H), lambda i, tok: (0, 0)),        # c_n
        ],
        scratch_shapes=[
            pltpu.VMEM((S * B, E), cd),            # gathered embeddings (time-major)
            pltpu.VMEM((B * S, H), jnp.float32),   # hidden history (batch-major)
        ],
    )

    out2d, h_n, c_n = pl.pallas_call(
        kernel,
        grid_spec=grid_spec,
        out_shape=(
            jax.ShapeDtypeStruct((B * S, O), jnp.float32),
            jax.ShapeDtypeStruct((B, H), jnp.float32),
            jax.ShapeDtypeStruct((B, H), jnp.float32),
        ),
        compiler_params=pltpu.CompilerParams(
            # the recurrence is sequential and lives inside the kernel
            dimension_semantics=("arbitrary",),
        ),
    )(features.astype(jnp.int32), embed_w, h0[0], c0[0], wih, whh, b, wfc, bfc)

    # Rows are already batch-major (row = b*S + t): pure reshape, no transpose.
    output = out2d.reshape(B, S, O)
    return output, (h_n[None], c_n[None])


# ----------------------------------------------------------------------------
# Deterministic parameter construction (matches the module's init scheme:
# normal embedding, xavier-uniform LSTM/fc weights, zero biases).
# ----------------------------------------------------------------------------
def init_params(key, input_size, embed_size, hidden_size, output_size):
    k_embed, k_ih, k_hh, k_fc = jax.random.split(key, 4)

    def xavier_uniform(k, fan_out, fan_in, shape):
        bound = jnp.sqrt(6.0 / (fan_in + fan_out))
        return jax.random.uniform(k, shape, jnp.float32, -bound, bound)

    embed = jax.random.normal(k_embed, (input_size, embed_size), jnp.float32)
    # PyTorch weight_ih_l0: (4H, E) -> stored transposed (E, 4H)
    w_ih = xavier_uniform(k_ih, 4 * hidden_size, embed_size,
                          (embed_size, 4 * hidden_size))
    # PyTorch weight_hh_l0: (4H, H) -> stored transposed (H, 4H)
    w_hh = xavier_uniform(k_hh, 4 * hidden_size, hidden_size,
                          (hidden_size, 4 * hidden_size))
    b = jnp.zeros((1, 4 * hidden_size), jnp.float32)   # b_ih + b_hh, both zero
    # PyTorch fc.weight: (O, H) -> stored transposed (H, O)
    w_fc = xavier_uniform(k_fc, output_size, hidden_size,
                          (hidden_size, output_size))
    b_fc = jnp.zeros((1, output_size), jnp.float32)
    return {"embed": embed, "w_ih": w_ih, "w_hh": w_hh, "b": b,
            "w_fc": w_fc, "b_fc": b_fc}


if __name__ == "__main__":
    # Small shapes consistent with the module's forward.
    input_size = 16    # vocab size
    embed_size = 32
    hidden_size = 32
    output_size = 16
    batch_size = 2
    seq_len = 8
    num_layers = 1

    key = jax.random.PRNGKey(0)
    k_params, k_feat = jax.random.split(key)
    params = init_params(k_params, input_size, embed_size, hidden_size,
                         output_size)

    features = jax.random.randint(k_feat, (batch_size, seq_len), 0, input_size,
                                  dtype=jnp.int32)
    # init_zero_state
    h0 = jnp.zeros((num_layers, batch_size, hidden_size), jnp.float32)
    c0 = jnp.zeros((num_layers, batch_size, hidden_size), jnp.float32)

    output, (h_n, c_n) = simple_lstm_generator_forward(features, (h0, c0),
                                                       params)
    jax.block_until_ready((output, h_n, c_n))

    assert output.shape == (batch_size, seq_len, output_size)
    assert h_n.shape == (num_layers, batch_size, hidden_size)
    assert c_n.shape == (num_layers, batch_size, hidden_size)
    print("KERNEL_OK")
</pallas_src>

<mosaic_0001>
module attributes {stable_mosaic.version = 11 : i64} {
  func.func @_lstm_fused_kernel(%arg0: i32, %arg1: memref<2x8xi32, #tpu.memory_space<smem>>, %arg2: memref<16x32xf32, #tpu.memory_space<vmem>>, %arg3: memref<2x32xf32, #tpu.memory_space<vmem>>, %arg4: memref<2x32xf32, #tpu.memory_space<vmem>>, %arg5: memref<32x128xf32, #tpu.memory_space<vmem>>, %arg6: memref<32x128xf32, #tpu.memory_space<vmem>>, %arg7: memref<1x128xf32, #tpu.memory_space<vmem>>, %arg8: memref<32x16xf32, #tpu.memory_space<vmem>>, %arg9: memref<1x16xf32, #tpu.memory_space<vmem>>, %arg10: memref<16x16xf32, #tpu.memory_space<vmem>>, %arg11: memref<2x32xf32, #tpu.memory_space<vmem>>, %arg12: memref<2x32xf32, #tpu.memory_space<vmem>>, %arg13: memref<16x32xf32, #tpu.memory_space<vmem>>, %arg14: memref<16x32xf32, #tpu.memory_space<vmem>>) attributes {dimension_semantics = [#tpu.dimension_semantics<arbitrary>], iteration_bounds = array<i64: 1>, scalar_prefetch = 1 : i64, scratch_operands = 2 : i64, tpu.core_type = #tpu.core_type<tc>, window_params = [{pipeline_mode = #tpu.pipeline_mode<synchronous>, transform_indices = @transform_0, window_bounds = array<i64: 16, 32>}, {pipeline_mode = #tpu.pipeline_mode<synchronous>, transform_indices = @transform_1, window_bounds = array<i64: 2, 32>}, {pipeline_mode = #tpu.pipeline_mode<synchronous>, transform_indices = @transform_2, window_bounds = array<i64: 2, 32>}, {pipeline_mode = #tpu.pipeline_mode<synchronous>, transform_indices = @transform_3, window_bounds = array<i64: 32, 128>}, {pipeline_mode = #tpu.pipeline_mode<synchronous>, transform_indices = @transform_4, window_bounds = array<i64: 32, 128>}, {pipeline_mode = #tpu.pipeline_mode<synchronous>, transform_indices = @transform_5, window_bounds = array<i64: 1, 128>}, {pipeline_mode = #tpu.pipeline_mode<synchronous>, transform_indices = @transform_6, window_bounds = array<i64: 32, 16>}, {pipeline_mode = #tpu.pipeline_mode<synchronous>, transform_indices = @transform_7, window_bounds = array<i64: 1, 16>}, {pipeline_mode = #tpu.pipeline_mode<synchronous>, transform_indices = @transform_8, window_bounds = array<i64: 16, 16>}, {pipeline_mode = #tpu.pipeline_mode<synchronous>, transform_indices = @transform_9, window_bounds = array<i64: 2, 32>}, {pipeline_mode = #tpu.pipeline_mode<synchronous>, transform_indices = @transform_10, window_bounds = array<i64: 2, 32>}]} {
    %c0 = arith.constant 0 : index
    %c0_0 = arith.constant 0 : index
    %0 = memref.load %arg1[%c0, %c0_0] : memref<2x8xi32, #tpu.memory_space<smem>>
    %1 = arith.index_cast %0 : i32 to index
    %c0_1 = arith.constant 0 : index
    %2 = vector.load %arg2[%1, %c0_1] : memref<16x32xf32, #tpu.memory_space<vmem>>, vector<1x32xf32>
    %c0_2 = arith.constant 0 : index
    %c0_3 = arith.constant 0 : index
    %3 = vector.load %arg13[%c0_2, %c0_3] : memref<16x32xf32, #tpu.memory_space<vmem>>, vector<1x32xf32>
    tpu.vector_store %arg13[%c0_2, %c0_3], %2 {strides = array<i32>} : memref<16x32xf32, #tpu.memory_space<vmem>>, vector<1x32xf32>,
    %c1 = arith.constant 1 : index
    %c0_4 = arith.constant 0 : index
    %4 = memref.load %arg1[%c1, %c0_4] : memref<2x8xi32, #tpu.memory_space<smem>>
    %5 = arith.index_cast %4 : i32 to index
    %c0_5 = arith.constant 0 : index
    %6 = vector.load %arg2[%5, %c0_5] : memref<16x32xf32, #tpu.memory_space<vmem>>, vector<1x32xf32>
    %c1_6 = arith.constant 1 : index
    %c0_7 = arith.constant 0 : index
    %7 = vector.load %arg13[%c1_6, %c0_7] : memref<16x32xf32, #tpu.memory_space<vmem>>, vector<1x32xf32>
    tpu.vector_store %arg13[%c1_6, %c0_7], %6 {strides = array<i32>} : memref<16x32xf32, #tpu.memory_space<vmem>>, vector<1x32xf32>,
    %c0_8 = arith.constant 0 : index
    %c1_9 = arith.constant 1 : index
    %8 = memref.load %arg1[%c0_8, %c1_9] : memref<2x8xi32, #tpu.memory_space<smem>>
    %9 = arith.index_cast %8 : i32 to index
    %c0_10 = arith.constant 0 : index
    %10 = vector.load %arg2[%9, %c0_10] : memref<16x32xf32, #tpu.memory_space<vmem>>, vector<1x32xf32>
    %c2 = arith.constant 2 : index
    %c0_11 = arith.constant 0 : index
    %11 = vector.load %arg13[%c2, %c0_11] : memref<16x32xf32, #tpu.memory_space<vmem>>, vector<1x32xf32>
    tpu.vector_store %arg13[%c2, %c0_11], %10 {strides = array<i32>} : memref<16x32xf32, #tpu.memory_space<vmem>>, vector<1x32xf32>,
    %c1_12 = arith.constant 1 : index
    %c1_13 = arith.constant 1 : index
    %12 = memref.load %arg1[%c1_12, %c1_13] : memref<2x8xi32, #tpu.memory_space<smem>>
    %13 = arith.index_cast %12 : i32 to index
    %c0_14 = arith.constant 0 : index
    %14 = vector.load %arg2[%13, %c0_14] : memref<16x32xf32, #tpu.memory_space<vmem>>, vector<1x32xf32>
    %c3 = arith.constant 3 : index
    %c0_15 = arith.constant 0 : index
    %15 = vector.load %arg13[%c3, %c0_15] : memref<16x32xf32, #tpu.memory_space<vmem>>, vector<1x32xf32>
    tpu.vector_store %arg13[%c3, %c0_15], %14 {strides = array<i32>} : memref<16x32xf32, #tpu.memory_space<vmem>>, vector<1x32xf32>,
    %c0_16 = arith.constant 0 : index
    %c2_17 = arith.constant 2 : index
    %16 = memref.load %arg1[%c0_16, %c2_17] : memref<2x8xi32, #tpu.memory_space<smem>>
    %17 = arith.index_cast %16 : i32 to index
    %c0_18 = arith.constant 0 : index
    %18 = vector.load %arg2[%17, %c0_18] : memref<16x32xf32, #tpu.memory_space<vmem>>, vector<1x32xf32>
    %c4 = arith.constant 4 : index
    %c0_19 = arith.constant 0 : index
    %19 = vector.load %arg13[%c4, %c0_19] : memref<16x32xf32, #tpu.memory_space<vmem>>, vector<1x32xf32>
    tpu.vector_store %arg13[%c4, %c0_19], %18 {strides = array<i32>} : memref<16x32xf32, #tpu.memory_space<vmem>>, vector<1x32xf32>,
    %c1_20 = arith.constant 1 : index
    %c2_21 = arith.constant 2 : index
    %20 = memref.load %arg1[%c1_20, %c2_21] : memref<2x8xi32, #tpu.memory_space<smem>>
    %21 = arith.index_cast %20 : i32 to index
    %c0_22 = arith.constant 0 : index
    %22 = vector.load %arg2[%21, %c0_22] : memref<16x32xf32, #tpu.memory_space<vmem>>, vector<1x32xf32>
    %c5 = arith.constant 5 : index
    %c0_23 = arith.constant 0 : index
    %23 = vector.load %arg13[%c5, %c0_23] : memref<16x32xf32, #tpu.memory_space<vmem>>, vector<1x32xf32>
    tpu.vector_store %arg13[%c5, %c0_23], %22 {strides = array<i32>} : memref<16x32xf32, #tpu.memory_space<vmem>>, vector<1x32xf32>,
    %c0_24 = arith.constant 0 : index
    %c3_25 = arith.constant 3 : index
    %24 = memref.load %arg1[%c0_24, %c3_25] : memref<2x8xi32, #tpu.memory_space<smem>>
    %25 = arith.index_cast %24 : i32 to index
    %c0_26 = arith.constant 0 : index
    %26 = vector.load %arg2[%25, %c0_26] : memref<16x32xf32, #tpu.memory_space<vmem>>, vector<1x32xf32>
    %c6 = arith.constant 6 : index
    %c0_27 = arith.constant 0 : index
    %27 = vector.load %arg13[%c6, %c0_27] : memref<16x32xf32, #tpu.memory_space<vmem>>, vector<1x32xf32>
    tpu.vector_store %arg13[%c6, %c0_27], %26 {strides = array<i32>} : memref<16x32xf32, #tpu.memory_space<vmem>>, vector<1x32xf32>,
    %c1_28 = arith.constant 1 : index
    %c3_29 = arith.constant 3 : index
    %28 = memref.load %arg1[%c1_28, %c3_29] : memref<2x8xi32, #tpu.memory_space<smem>>
    %29 = arith.index_cast %28 : i32 to index
    %c0_30 = arith.constant 0 : index
    %30 = vector.load %arg2[%29, %c0_30] : memref<16x32xf32, #tpu.memory_space<vmem>>, vector<1x32xf32>
    %c7 = arith.constant 7 : index
    %c0_31 = arith.constant 0 : index
    %31 = vector.load %arg13[%c7, %c0_31] : memref<16x32xf32, #tpu.memory_space<vmem>>, vector<1x32xf32>
    tpu.vector_store %arg13[%c7, %c0_31], %30 {strides = array<i32>} : memref<16x32xf32, #tpu.memory_space<vmem>>, vector<1x32xf32>,
    %c0_32 = arith.constant 0 : index
    %c4_33 = arith.constant 4 : index
    %32 = memref.load %arg1[%c0_32, %c4_33] : memref<2x8xi32, #tpu.memory_space<smem>>
    %33 = arith.index_cast %32 : i32 to index
    %c0_34 = arith.constant 0 : index
    %34 = vector.load %arg2[%33, %c0_34] : memref<16x32xf32, #tpu.memory_space<vmem>>, vector<1x32xf32>
    %c8 = arith.constant 8 : index
    %c0_35 = arith.constant 0 : index
    %35 = vector.load %arg13[%c8, %c0_35] : memref<16x32xf32, #tpu.memory_space<vmem>>, vector<1x32xf32>
    tpu.vector_store %arg13[%c8, %c0_35], %34 {strides = array<i32>} : memref<16x32xf32, #tpu.memory_space<vmem>>, vector<1x32xf32>,
    %c1_36 = arith.constant 1 : index
    %c4_37 = arith.constant 4 : index
    %36 = memref.load %arg1[%c1_36, %c4_37] : memref<2x8xi32, #tpu.memory_space<smem>>
    %37 = arith.index_cast %36 : i32 to index
    %c0_38 = arith.constant 0 : index
    %38 = vector.load %arg2[%37, %c0_38] : memref<16x32xf32, #tpu.memory_space<vmem>>, vector<1x32xf32>
    %c9 = arith.constant 9 : index
    %c0_39 = arith.constant 0 : index
    %39 = vector.load %arg13[%c9, %c0_39] : memref<16x32xf32, #tpu.memory_space<vmem>>, vector<1x32xf32>
    tpu.vector_store %arg13[%c9, %c0_39], %38 {strides = array<i32>} : memref<16x32xf32, #tpu.memory_space<vmem>>, vector<1x32xf32>,
    %c0_40 = arith.constant 0 : index
    %c5_41 = arith.constant 5 : index
    %40 = memref.load %arg1[%c0_40, %c5_41] : memref<2x8xi32, #tpu.memory_space<smem>>
    %41 = arith.index_cast %40 : i32 to index
    %c0_42 = arith.constant 0 : index
    %42 = vector.load %arg2[%41, %c0_42] : memref<16x32xf32, #tpu.memory_space<vmem>>, vector<1x32xf32>
    %c10 = arith.constant 10 : index
    %c0_43 = arith.constant 0 : index
    %43 = vector.load %arg13[%c10, %c0_43] : memref<16x32xf32, #tpu.memory_space<vmem>>, vector<1x32xf32>
    tpu.vector_store %arg13[%c10, %c0_43], %42 {strides = array<i32>} : memref<16x32xf32, #tpu.memory_space<vmem>>, vector<1x32xf32>,
    %c1_44 = arith.constant 1 : index
    %c5_45 = arith.constant 5 : index
    %44 = memref.load %arg1[%c1_44, %c5_45] : memref<2x8xi32, #tpu.memory_space<smem>>
    %45 = arith.index_cast %44 : i32 to index
    %c0_46 = arith.constant 0 : index
    %46 = vector.load %arg2[%45, %c0_46] : memref<16x32xf32, #tpu.memory_space<vmem>>, vector<1x32xf32>
    %c11 = arith.constant 11 : index
    %c0_47 = arith.constant 0 : index
    %47 = vector.load %arg13[%c11, %c0_47] : memref<16x32xf32, #tpu.memory_space<vmem>>, vector<1x32xf32>
    tpu.vector_store %arg13[%c11, %c0_47], %46 {strides = array<i32>} : memref<16x32xf32, #tpu.memory_space<vmem>>, vector<1x32xf32>,
    %c0_48 = arith.constant 0 : index
    %c6_49 = arith.constant 6 : index
    %48 = memref.load %arg1[%c0_48, %c6_49] : memref<2x8xi32, #tpu.memory_space<smem>>
    %49 = arith.index_cast %48 : i32 to index
    %c0_50 = arith.constant 0 : index
    %50 = vector.load %arg2[%49, %c0_50] : memref<16x32xf32, #tpu.memory_space<vmem>>, vector<1x32xf32>
    %c12 = arith.constant 12 : index
    %c0_51 = arith.constant 0 : index
    %51 = vector.load %arg13[%c12, %c0_51] : memref<16x32xf32, #tpu.memory_space<vmem>>, vector<1x32xf32>
    tpu.vector_store %arg13[%c12, %c0_51], %50 {strides = array<i32>} : memref<16x32xf32, #tpu.memory_space<vmem>>, vector<1x32xf32>,
    %c1_52 = arith.constant 1 : index
    %c6_53 = arith.constant 6 : index
    %52 = memref.load %arg1[%c1_52, %c6_53] : memref<2x8xi32, #tpu.memory_space<smem>>
    %53 = arith.index_cast %52 : i32 to index
    %c0_54 = arith.constant 0 : index
    %54 = vector.load %arg2[%53, %c0_54] : memref<16x32xf32, #tpu.memory_space<vmem>>, vector<1x32xf32>
    %c13 = arith.constant 13 : index
    %c0_55 = arith.constant 0 : index
    %55 = vector.load %arg13[%c13, %c0_55] : memref<16x32xf32, #tpu.memory_space<vmem>>, vector<1x32xf32>
    tpu.vector_store %arg13[%c13, %c0_55], %54 {strides = array<i32>} : memref<16x32xf32, #tpu.memory_space<vmem>>, vector<1x32xf32>,
    %c0_56 = arith.constant 0 : index
    %c7_57 = arith.constant 7 : index
    %56 = memref.load %arg1[%c0_56, %c7_57] : memref<2x8xi32, #tpu.memory_space<smem>>
    %57 = arith.index_cast %56 : i32 to index
    %c0_58 = arith.constant 0 : index
    %58 = vector.load %arg2[%57, %c0_58] : memref<16x32xf32, #tpu.memory_space<vmem>>, vector<1x32xf32>
    %c14 = arith.constant 14 : index
    %c0_59 = arith.constant 0 : index
    %59 = vector.load %arg13[%c14, %c0_59] : memref<16x32xf32, #tpu.memory_space<vmem>>, vector<1x32xf32>
    tpu.vector_store %arg13[%c14, %c0_59], %58 {strides = array<i32>} : memref<16x32xf32, #tpu.memory_space<vmem>>, vector<1x32xf32>,
    %c1_60 = arith.constant 1 : index
    %c7_61 = arith.constant 7 : index
    %60 = memref.load %arg1[%c1_60, %c7_61] : memref<2x8xi32, #tpu.memory_space<smem>>
    %61 = arith.index_cast %60 : i32 to index
    %c0_62 = arith.constant 0 : index
    %62 = vector.load %arg2[%61, %c0_62] : memref<16x32xf32, #tpu.memory_space<vmem>>, vector<1x32xf32>
    %c15 = arith.constant 15 : index
    %c0_63 = arith.constant 0 : index
    %63 = vector.load %arg13[%c15, %c0_63] : memref<16x32xf32, #tpu.memory_space<vmem>>, vector<1x32xf32>
    tpu.vector_store %arg13[%c15, %c0_63], %62 {strides = array<i32>} : memref<16x32xf32, #tpu.memory_space<vmem>>, vector<1x32xf32>,
    %c0_64 = arith.constant 0 : index
    %c0_65 = arith.constant 0 : index
    %64 = vector.load %arg13[%c0_64, %c0_65] : memref<16x32xf32, #tpu.memory_space<vmem>>, vector<16x32xf32>
    %c0_66 = arith.constant 0 : index
    %c0_67 = arith.constant 0 : index
    %65 = vector.load %arg5[%c0_66, %c0_67] : memref<32x128xf32, #tpu.memory_space<vmem>>, vector<32x128xf32>
    %cst = arith.constant dense<0.000000e+00> : vector<16x128xf32>
    %66 = tpu.matmul %64, %65, %cst {dimension_numbers = #tpu.dot_dimension_numbers<[1], [0], [0], [1], [0, 0, 1, 1], [], []>} : vector<16x32xf32>, vector<32x128xf32>, vector<16x128xf32> -> vector<16x128xf32>
    %c0_68 = arith.constant 0 : index
    %c0_69 = arith.constant 0 : index
    %67 = vector.load %arg7[%c0_68, %c0_69] : memref<1x128xf32, #tpu.memory_space<vmem>>, vector<1x128xf32>
    %68 = vector.broadcast %67 : vector<1x128xf32> to vector<16x128xf32>
    %69 = arith.addf %66, %68 : vector<16x128xf32>
    %c0_70 = arith.constant 0 : index
    %c0_71 = arith.constant 0 : index
    %70 = vector.load %arg6[%c0_70, %c0_71] : memref<32x128xf32, #tpu.memory_space<vmem>>, vector<32x128xf32>
    %c0_72 = arith.constant 0 : index
    %c0_73 = arith.constant 0 : index
    %71 = vector.load %arg3[%c0_72, %c0_73] : memref<2x32xf32, #tpu.memory_space<vmem>>, vector<2x32xf32>
    %c0_74 = arith.constant 0 : index
    %c0_75 = arith.constant 0 : index
    %72 = vector.load %arg4[%c0_74, %c0_75] : memref<2x32xf32, #tpu.memory_space<vmem>>, vector<2x32xf32>
    %73 = vector.extract_strided_slice %69 {offsets = [0, 0], sizes = [2, 128], strides = [1, 1]} : vector<16x128xf32> to vector<2x128xf32>
    %cst_76 = arith.constant dense<0.000000e+00> : vector<2x128xf32>
    %74 = tpu.matmul %71, %70, %cst_76 {dimension_numbers = #tpu.dot_dimension_numbers<[1], [0], [0], [1], [0, 0, 1, 1], [], []>} : vector<2x32xf32>, vector<32x128xf32>, vector<2x128xf32> -> vector<2x128xf32>
    %75 = arith.addf %73, %74 : vector<2x128xf32>
    %76 = arith.negf %75 : vector<2x128xf32>
    %77 = math.exp %76 : vector<2x128xf32>
    %cst_77 = arith.constant 1.000000e+00 : f32
    %78 = vector.broadcast %cst_77 : f32 to vector<2x128xf32>
    %79 = arith.addf %78, %77 : vector<2x128xf32>
    %80 = arith.divf %78, %79 : vector<2x128xf32>
    %81 = math.tanh %75 : vector<2x128xf32>
    %82 = vector.extract_strided_slice %80 {offsets = [0, 0], sizes = [2, 32], strides = [1, 1]} : vector<2x128xf32> to vector<2x32xf32>
    %83 = vector.extract_strided_slice %80 {offsets = [0, 32], sizes = [2, 32], strides = [1, 1]} : vector<2x128xf32> to vector<2x32xf32>
    %84 = vector.extract_strided_slice %81 {offsets = [0, 64], sizes = [2, 32], strides = [1, 1]} : vector<2x128xf32> to vector<2x32xf32>
    %85 = vector.extract_strided_slice %80 {offsets = [0, 96], sizes = [2, 32], strides = [1, 1]} : vector<2x128xf32> to vector<2x32xf32>
    %86 = arith.mulf %83, %72 : vector<2x32xf32>
    %87 = arith.mulf %82, %84 : vector<2x32xf32>
    %88 = arith.addf %86, %87 : vector<2x32xf32>
    %89 = math.tanh %88 : vector<2x32xf32>
    %90 = arith.mulf %85, %89 : vector<2x32xf32>
    %91 = vector.extract_strided_slice %90 {offsets = [0, 0], sizes = [1, 32], strides = [1, 1]} : vector<2x32xf32> to vector<1x32xf32>
    %c0_78 = arith.constant 0 : index
    %c0_79 = arith.constant 0 : index
    %92 = vector.load %arg14[%c0_78, %c0_79] : memref<16x32xf32, #tpu.memory_space<vmem>>, vector<1x32xf32>
    tpu.vector_store %arg14[%c0_78, %c0_79], %91 {strides = array<i32>} : memref<16x32xf32, #tpu.memory_space<vmem>>, vector<1x32xf32>,
    %93 = vector.extract_strided_slice %90 {offsets = [1, 0], sizes = [1, 32], strides = [1, 1]} : vector<2x32xf32> to vector<1x32xf32>
    %c8_80 = arith.constant 8 : index
    %c0_81 = arith.constant 0 : index
    %94 = vector.load %arg14[%c8_80, %c0_81] : memref<16x32xf32, #tpu.memory_space<vmem>>, vector<1x32xf32>
    tpu.vector_store %arg14[%c8_80, %c0_81], %93 {strides = array<i32>} : memref<16x32xf32, #tpu.memory_space<vmem>>, vector<1x32xf32>,
    %95 = vector.extract_strided_slice %69 {offsets = [2, 0], sizes = [2, 128], strides = [1, 1]} : vector<16x128xf32> to vector<2x128xf32>
    %cst_82 = arith.constant dense<0.000000e+00> : vector<2x128xf32>
    %96 = tpu.matmul %90, %70, %cst_82 {dimension_numbers = #tpu.dot_dimension_numbers<[1], [0], [0], [1], [0, 0, 1, 1], [], []>} : vector<2x32xf32>, vector<32x128xf32>, vector<2x128xf32> -> vector<2x128xf32>
    %97 = arith.addf %95, %96 : vector<2x128xf32>
    %98 = arith.negf %97 : vector<2x128xf32>
    %99 = math.exp %98 : vector<2x128xf32>
    %cst_83 = arith.constant 1.000000e+00 : f32
    %100 = vector.broadcast %cst_83 : f32 to vector<2x128xf32>
    %101 = arith.addf %100, %99 : vector<2x128xf32>
    %102 = arith.divf %100, %101 : vector<2x128xf32>
    %103 = math.tanh %97 : vector<2x128xf32>
    %104 = vector.extract_strided_slice %102 {offsets = [0, 0], sizes = [2, 32], strides = [1, 1]} : vector<2x128xf32> to vector<2x32xf32>
    %105 = vector.extract_strided_slice %102 {offsets = [0, 32], sizes = [2, 32], strides = [1, 1]} : vector<2x128xf32> to vector<2x32xf32>
    %106 = vector.extract_strided_slice %103 {offsets = [0, 64], sizes = [2, 32], strides = [1, 1]} : vector<2x128xf32> to vector<2x32xf32>
    %107 = vector.extract_strided_slice %102 {offsets = [0, 96], sizes = [2, 32], strides = [1, 1]} : vector<2x128xf32> to vector<2x32xf32>
    %108 = arith.mulf %105, %88 : vector<2x32xf32>
    %109 = arith.mulf %104, %106 : vector<2x32xf32>
    %110 = arith.addf %108, %109 : vector<2x32xf32>
    %111 = math.tanh %110 : vector<2x32xf32>
    %112 = arith.mulf %107, %111 : vector<2x32xf32>
    %113 = vector.extract_strided_slice %112 {offsets = [0, 0], sizes = [1, 32], strides = [1, 1]} : vector<2x32xf32> to vector<1x32xf32>
    %c1_84 = arith.constant 1 : index
    %c0_85 = arith.constant 0 : index
    %114 = vector.load %arg14[%c1_84, %c0_85] : memref<16x32xf32, #tpu.memory_space<vmem>>, vector<1x32xf32>
    tpu.vector_store %arg14[%c1_84, %c0_85], %113 {strides = array<i32>} : memref<16x32xf32, #tpu.memory_space<vmem>>, vector<1x32xf32>,
    %115 = vector.extract_strided_slice %112 {offsets = [1, 0], sizes = [1, 32], strides = [1, 1]} : vector<2x32xf32> to vector<1x32xf32>
    %c9_86 = arith.constant 9 : index
    %c0_87 = arith.constant 0 : index
    %116 = vector.load %arg14[%c9_86, %c0_87] : memref<16x32xf32, #tpu.memory_space<vmem>>, vector<1x32xf32>
    tpu.vector_store %arg14[%c9_86, %c0_87], %115 {strides = array<i32>} : memref<16x32xf32, #tpu.memory_space<vmem>>, vector<1x32xf32>,
    %117 = vector.extract_strided_slice %69 {offsets = [4, 0], sizes = [2, 128], strides = [1, 1]} : vector<16x128xf32> to vector<2x128xf32>
    %cst_88 = arith.constant dense<0.000000e+00> : vector<2x128xf32>
    %118 = tpu.matmul %112, %70, %cst_88 {dimension_numbers = #tpu.dot_dimension_numbers<[1], [0], [0], [1], [0, 0, 1, 1], [], []>} : vector<2x32xf32>, vector<32x128xf32>, vector<2x128xf32> -> vector<2x128xf32>
    %119 = arith.addf %117, %118 : vector<2x128xf32>
    %120 = arith.negf %119 : vector<2x128xf32>
    %121 = math.exp %120 : vector<2x128xf32>
    %cst_89 = arith.constant 1.000000e+00 : f32
    %122 = vector.broadcast %cst_89 : f32 to vector<2x128xf32>
    %123 = arith.addf %122, %121 : vector<2x128xf32>
    %124 = arith.divf %122, %123 : vector<2x128xf32>
    %125 = math.tanh %119 : vector<2x128xf32>
    %126 = vector.extract_strided_slice %124 {offsets = [0, 0], sizes = [2, 32], strides = [1, 1]} : vector<2x128xf32> to vector<2x32xf32>
    %127 = vector.extract_strided_slice %124 {offsets = [0, 32], sizes = [2, 32], strides = [1, 1]} : vector<2x128xf32> to vector<2x32xf32>
    %128 = vector.extract_strided_slice %125 {offsets = [0, 64], sizes = [2, 32], strides = [1, 1]} : vector<2x128xf32> to vector<2x32xf32>
    %129 = vector.extract_strided_slice %124 {offsets = [0, 96], sizes = [2, 32], strides = [1, 1]} : vector<2x128xf32> to vector<2x32xf32>
    %130 = arith.mulf %127, %110 : vector<2x32xf32>
    %131 = arith.mulf %126, %128 : vector<2x32xf32>
    %132 = arith.addf %130, %131 : vector<2x32xf32>
    %133 = math.tanh %132 : vector<2x32xf32>
    %134 = arith.mulf %129, %133 : vector<2x32xf32>
    %135 = vector.extract_strided_slice %134 {offsets = [0, 0], sizes = [1, 32], strides = [1, 1]} : vector<2x32xf32> to vector<1x32xf32>
    %c2_90 = arith.constant 2 : index
    %c0_91 = arith.constant 0 : index
    %136 = vector.load %arg14[%c2_90, %c0_91] : memref<16x32xf32, #tpu.memory_space<vmem>>, vector<1x32xf32>
    tpu.vector_store %arg14[%c2_90, %c0_91], %135 {strides = array<i32>} : memref<16x32xf32, #tpu.memory_space<vmem>>, vector<1x32xf32>,
    %137 = vector.extract_strided_slice %134 {offsets = [1, 0], sizes = [1, 32], strides = [1, 1]} : vector<2x32xf32> to vector<1x32xf32>
    %c10_92 = arith.constant 10 : index
    %c0_93 = arith.constant 0 : index
    %138 = vector.load %arg14[%c10_92, %c0_93] : memref<16x32xf32, #tpu.memory_space<vmem>>, vector<1x32xf32>
    tpu.vector_store %arg14[%c10_92, %c0_93], %137 {strides = array<i32>} : memref<16x32xf32, #tpu.memory_space<vmem>>, vector<1x32xf32>,
    %139 = vector.extract_strided_slice %69 {offsets = [6, 0], sizes = [2, 128], strides = [1, 1]} : vector<16x128xf32> to vector<2x128xf32>
    %cst_94 = arith.constant dense<0.000000e+00> : vector<2x128xf32>
    %140 = tpu.matmul %134, %70, %cst_94 {dimension_numbers = #tpu.dot_dimension_numbers<[1], [0], [0], [1], [0, 0, 1, 1], [], []>} : vector<2x32xf32>, vector<32x128xf32>, vector<2x128xf32> -> vector<2x128xf32>
    %141 = arith.addf %139, %140 : vector<2x128xf32>
    %142 = arith.negf %141 : vector<2x128xf32>
    %143 = math.exp %142 : vector<2x128xf32>
    %cst_95 = arith.constant 1.000000e+00 : f32
    %144 = vector.broadcast %cst_95 : f32 to vector<2x128xf32>
    %145 = arith.addf %144, %143 : vector<2x128xf32>
    %146 = arith.divf %144, %145 : vector<2x128xf32>
    %147 = math.tanh %141 : vector<2x128xf32>
    %148 = vector.extract_strided_slice %146 {offsets = [0, 0], sizes = [2, 32], strides = [1, 1]} : vector<2x128xf32> to vector<2x32xf32>
    %149 = vector.extract_strided_slice %146 {offsets = [0, 32], sizes = [2, 32], strides = [1, 1]} : vector<2x128xf32> to vector<2x32xf32>
    %150 = vector.extract_strided_slice %147 {offsets = [0, 64], sizes = [2, 32], strides = [1, 1]} : vector<2x128xf32> to vector<2x32xf32>
    %151 = vector.extract_strided_slice %146 {offsets = [0, 96], sizes = [2, 32], strides = [1, 1]} : vector<2x128xf32> to vector<2x32xf32>
    %152 = arith.mulf %149, %132 : vector<2x32xf32>
    %153 = arith.mulf %148, %150 : vector<2x32xf32>
    %154 = arith.addf %152, %153 : vector<2x32xf32>
    %155 = math.tanh %154 : vector<2x32xf32>
    %156 = arith.mulf %151, %155 : vector<2x32xf32>
    %157 = vector.extract_strided_slice %156 {offsets = [0, 0], sizes = [1, 32], strides = [1, 1]} : vector<2x32xf32> to vector<1x32xf32>
    %c3_96 = arith.constant 3 : index
    %c0_97 = arith.constant 0 : index
    %158 = vector.load %arg14[%c3_96, %c0_97] : memref<16x32xf32, #tpu.memory_space<vmem>>, vector<1x32xf32>
    tpu.vector_store %arg14[%c3_96, %c0_97], %157 {strides = array<i32>} : memref<16x32xf32, #tpu.memory_space<vmem>>, vector<1x32xf32>,
    %159 = vector.extract_strided_slice %156 {offsets = [1, 0], sizes = [1, 32], strides = [1, 1]} : vector<2x32xf32> to vector<1x32xf32>
    %c11_98 = arith.constant 11 : index
    %c0_99 = arith.constant 0 : index
    %160 = vector.load %arg14[%c11_98, %c0_99] : memref<16x32xf32, #tpu.memory_space<vmem>>, vector<1x32xf32>
    tpu.vector_store %arg14[%c11_98, %c0_99], %159 {strides = array<i32>} : memref<16x32xf32, #tpu.memory_space<vmem>>, vector<1x32xf32>,
    %161 = vector.extract_strided_slice %69 {offsets = [8, 0], sizes = [2, 128], strides = [1, 1]} : vector<16x128xf32> to vector<2x128xf32>
    %cst_100 = arith.constant dense<0.000000e+00> : vector<2x128xf32>
    %162 = tpu.matmul %156, %70, %cst_100 {dimension_numbers = #tpu.dot_dimension_numbers<[1], [0], [0], [1], [0, 0, 1, 1], [], []>} : vector<2x32xf32>, vector<32x128xf32>, vector<2x128xf32> -> vector<2x128xf32>
    %163 = arith.addf %161, %162 : vector<2x128xf32>
    %164 = arith.negf %163 : vector<2x128xf32>
    %165 = math.exp %164 : vector<2x128xf32>
    %cst_101 = arith.constant 1.000000e+00 : f32
    %166 = vector.broadcast %cst_101 : f32 to vector<2x128xf32>
    %167 = arith.addf %166, %165 : vector<2x128xf32>
    %168 = arith.divf %166, %167 : vector<2x128xf32>
    %169 = math.tanh %163 : vector<2x128xf32>
    %170 = vector.extract_strided_slice %168 {offsets = [0, 0], sizes = [2, 32], strides = [1, 1]} : vector<2x128xf32> to vector<2x32xf32>
    %171 = vector.extract_strided_slice %168 {offsets = [0, 32], sizes = [2, 32], strides = [1, 1]} : vector<2x128xf32> to vector<2x32xf32>
    %172 = vector.extract_strided_slice %169 {offsets = [0, 64], sizes = [2, 32], strides = [1, 1]} : vector<2x128xf32> to vector<2x32xf32>
    %173 = vector.extract_strided_slice %168 {offsets = [0, 96], sizes = [2, 32], strides = [1, 1]} : vector<2x128xf32> to vector<2x32xf32>
    %174 = arith.mulf %171, %154 : vector<2x32xf32>
    %175 = arith.mulf %170, %172 : vector<2x32xf32>
    %176 = arith.addf %174, %175 : vector<2x32xf32>
    %177 = math.tanh %176 : vector<2x32xf32>
    %178 = arith.mulf %173, %177 : vector<2x32xf32>
    %179 = vector.extract_strided_slice %178 {offsets = [0, 0], sizes = [1, 32], strides = [1, 1]} : vector<2x32xf32> to vector<1x32xf32>
    %c4_102 = arith.constant 4 : index
    %c0_103 = arith.constant 0 : index
    %180 = vector.load %arg14[%c4_102, %c0_103] : memref<16x32xf32, #tpu.memory_space<vmem>>, vector<1x32xf32>
    tpu.vector_store %arg14[%c4_102, %c0_103], %179 {strides = array<i32>} : memref<16x32xf32, #tpu.memory_space<vmem>>, vector<1x32xf32>,
    %181 = vector.extract_strided_slice %178 {offsets = [1, 0], sizes = [1, 32], strides = [1, 1]} : vector<2x32xf32> to vector<1x32xf32>
    %c12_104 = arith.constant 12 : index
    %c0_105 = arith.constant 0 : index
    %182 = vector.load %arg14[%c12_104, %c0_105] : memref<16x32xf32, #tpu.memory_space<vmem>>, vector<1x32xf32>
    tpu.vector_store %arg14[%c12_104, %c0_105], %181 {strides = array<i32>} : memref<16x32xf32, #tpu.memory_space<vmem>>, vector<1x32xf32>,
    %183 = vector.extract_strided_slice %69 {offsets = [10, 0], sizes = [2, 128], strides = [1, 1]} : vector<16x128xf32> to vector<2x128xf32>
    %cst_106 = arith.constant dense<0.000000e+00> : vector<2x128xf32>
    %184 = tpu.matmul %178, %70, %cst_106 {dimension_numbers = #tpu.dot_dimension_numbers<[1], [0], [0], [1], [0, 0, 1, 1], [], []>} : vector<2x32xf32>, vector<32x128xf32>, vector<2x128xf32> -> vector<2x128xf32>
    %185 = arith.addf %183, %184 : vector<2x128xf32>
    %186 = arith.negf %185 : vector<2x128xf32>
    %187 = math.exp %186 : vector<2x128xf32>
    %cst_107 = arith.constant 1.000000e+00 : f32
    %188 = vector.broadcast %cst_107 : f32 to vector<2x128xf32>
    %189 = arith.addf %188, %187 : vector<2x128xf32>
    %190 = arith.divf %188, %189 : vector<2x128xf32>
    %191 = math.tanh %185 : vector<2x128xf32>
    %192 = vector.extract_strided_slice %190 {offsets = [0, 0], sizes = [2, 32], strides = [1, 1]} : vector<2x128xf32> to vector<2x32xf32>
    %193 = vector.extract_strided_slice %190 {offsets = [0, 32], sizes = [2, 32], strides = [1, 1]} : vector<2x128xf32> to vector<2x32xf32>
    %194 = vector.extract_strided_slice %191 {offsets = [0, 64], sizes = [2, 32], strides = [1, 1]} : vector<2x128xf32> to vector<2x32xf32>
    %195 = vector.extract_strided_slice %190 {offsets = [0, 96], sizes = [2, 32], strides = [1, 1]} : vector<2x128xf32> to vector<2x32xf32>
    %196 = arith.mulf %193, %176 : vector<2x32xf32>
    %197 = arith.mulf %192, %194 : vector<2x32xf32>
    %198 = arith.addf %196, %197 : vector<2x32xf32>
    %199 = math.tanh %198 : vector<2x32xf32>
    %200 = arith.mulf %195, %199 : vector<2x32xf32>
    %201 = vector.extract_strided_slice %200 {offsets = [0, 0], sizes = [1, 32], strides = [1, 1]} : vector<2x32xf32> to vector<1x32xf32>
    %c5_108 = arith.constant 5 : index
    %c0_109 = arith.constant 0 : index
    %202 = vector.load %arg14[%c5_108, %c0_109] : memref<16x32xf32, #tpu.memory_space<vmem>>, vector<1x32xf32>
    tpu.vector_store %arg14[%c5_108, %c0_109], %201 {strides = array<i32>} : memref<16x32xf32, #tpu.memory_space<vmem>>, vector<1x32xf32>,
    %203 = vector.extract_strided_slice %200 {offsets = [1, 0], sizes = [1, 32], strides = [1, 1]} : vector<2x32xf32> to vector<1x32xf32>
    %c13_110 = arith.constant 13 : index
    %c0_111 = arith.constant 0 : index
    %204 = vector.load %arg14[%c13_110, %c0_111] : memref<16x32xf32, #tpu.memory_space<vmem>>, vector<1x32xf32>
    tpu.vector_store %arg14[%c13_110, %c0_111], %203 {strides = array<i32>} : memref<16x32xf32, #tpu.memory_space<vmem>>, vector<1x32xf32>,
    %205 = vector.extract_strided_slice %69 {offsets = [12, 0], sizes = [2, 128], strides = [1, 1]} : vector<16x128xf32> to vector<2x128xf32>
    %cst_112 = arith.constant dense<0.000000e+00> : vector<2x128xf32>
    %206 = tpu.matmul %200, %70, %cst_112 {dimension_numbers = #tpu.dot_dimension_numbers<[1], [0], [0], [1], [0, 0, 1, 1], [], []>} : vector<2x32xf32>, vector<32x128xf32>, vector<2x128xf32> -> vector<2x128xf32>
    %207 = arith.addf %205, %206 : vector<2x128xf32>
    %208 = arith.negf %207 : vector<2x128xf32>
    %209 = math.exp %208 : vector<2x128xf32>
    %cst_113 = arith.constant 1.000000e+00 : f32
    %210 = vector.broadcast %cst_113 : f32 to vector<2x128xf32>
    %211 = arith.addf %210, %209 : vector<2x128xf32>
    %212 = arith.divf %210, %211 : vector<2x128xf32>
    %213 = math.tanh %207 : vector<2x128xf32>
    %214 = vector.extract_strided_slice %212 {offsets = [0, 0], sizes = [2, 32], strides = [1, 1]} : vector<2x128xf32> to vector<2x32xf32>
    %215 = vector.extract_strided_slice %212 {offsets = [0, 32], sizes = [2, 32], strides = [1, 1]} : vector<2x128xf32> to vector<2x32xf32>
    %216 = vector.extract_strided_slice %213 {offsets = [0, 64], sizes = [2, 32], strides = [1, 1]} : vector<2x128xf32> to vector<2x32xf32>
    %217 = vector.extract_strided_slice %212 {offsets = [0, 96], sizes = [2, 32], strides = [1, 1]} : vector<2x128xf32> to vector<2x32xf32>
    %218 = arith.mulf %215, %198 : vector<2x32xf32>
    %219 = arith.mulf %214, %216 : vector<2x32xf32>
    %220 = arith.addf %218, %219 : vector<2x32xf32>
    %221 = math.tanh %220 : vector<2x32xf32>
    %222 = arith.mulf %217, %221 : vector<2x32xf32>
    %223 = vector.extract_strided_slice %222 {offsets = [0, 0], sizes = [1, 32], strides = [1, 1]} : vector<2x32xf32> to vector<1x32xf32>
    %c6_114 = arith.constant 6 : index
    %c0_115 = arith.constant 0 : index
    %224 = vector.load %arg14[%c6_114, %c0_115] : memref<16x32xf32, #tpu.memory_space<vmem>>, vector<1x32xf32>
    tpu.vector_store %arg14[%c6_114, %c0_115], %223 {strides = array<i32>} : memref<16x32xf32, #tpu.memory_space<vmem>>, vector<1x32xf32>,
    %225 = vector.extract_strided_slice %222 {offsets = [1, 0], sizes = [1, 32], strides = [1, 1]} : vector<2x32xf32> to vector<1x32xf32>
    %c14_116 = arith.constant 14 : index
    %c0_117 = arith.constant 0 : index
    %226 = vector.load %arg14[%c14_116, %c0_117] : memref<16x32xf32, #tpu.memory_space<vmem>>, vector<1x32xf32>
    tpu.vector_store %arg14[%c14_116, %c0_117], %225 {strides = array<i32>} : memref<16x32xf32, #tpu.memory_space<vmem>>, vector<1x32xf32>,
    %227 = vector.extract_strided_slice %69 {offsets = [14, 0], sizes = [2, 128], strides = [1, 1]} : vector<16x128xf32> to vector<2x128xf32>
    %cst_118 = arith.constant dense<0.000000e+00> : vector<2x128xf32>
    %228 = tpu.matmul %222, %70, %cst_118 {dimension_numbers = #tpu.dot_dimension_numbers<[1], [0], [0], [1], [0, 0, 1, 1], [], []>} : vector<2x32xf32>, vector<32x128xf32>, vector<2x128xf32> -> vector<2x128xf32>
    %229 = arith.addf %227, %228 : vector<2x128xf32>
    %230 = arith.negf %229 : vector<2x128xf32>
    %231 = math.exp %230 : vector<2x128xf32>
    %cst_119 = arith.constant 1.000000e+00 : f32
    %232 = vector.broadcast %cst_119 : f32 to vector<2x128xf32>
    %233 = arith.addf %232, %231 : vector<2x128xf32>
    %234 = arith.divf %232, %233 : vector<2x128xf32>
    %235 = math.tanh %229 : vector<2x128xf32>
    %236 = vector.extract_strided_slice %234 {offsets = [0, 0], sizes = [2, 32], strides = [1, 1]} : vector<2x128xf32> to vector<2x32xf32>
    %237 = vector.extract_strided_slice %234 {offsets = [0, 32], sizes = [2, 32], strides = [1, 1]} : vector<2x128xf32> to vector<2x32xf32>
    %238 = vector.extract_strided_slice %235 {offsets = [0, 64], sizes = [2, 32], strides = [1, 1]} : vector<2x128xf32> to vector<2x32xf32>
    %239 = vector.extract_strided_slice %234 {offsets = [0, 96], sizes = [2, 32], strides = [1, 1]} : vector<2x128xf32> to vector<2x32xf32>
    %240 = arith.mulf %237, %220 : vector<2x32xf32>
    %241 = arith.mulf %236, %238 : vector<2x32xf32>
    %242 = arith.addf %240, %241 : vector<2x32xf32>
    %243 = math.tanh %242 : vector<2x32xf32>
    %244 = arith.mulf %239, %243 : vector<2x32xf32>
    %245 = vector.extract_strided_slice %244 {offsets = [0, 0], sizes = [1, 32], strides = [1, 1]} : vector<2x32xf32> to vector<1x32xf32>
    %c7_120 = arith.constant 7 : index
    %c0_121 = arith.constant 0 : index
    %246 = vector.load %arg14[%c7_120, %c0_121] : memref<16x32xf32, #tpu.memory_space<vmem>>, vector<1x32xf32>
    tpu.vector_store %arg14[%c7_120, %c0_121], %245 {strides = array<i32>} : memref<16x32xf32, #tpu.memory_space<vmem>>, vector<1x32xf32>,
    %247 = vector.extract_strided_slice %244 {offsets = [1, 0], sizes = [1, 32], strides = [1, 1]} : vector<2x32xf32> to vector<1x32xf32>
    %c15_122 = arith.constant 15 : index
    %c0_123 = arith.constant 0 : index
    %248 = vector.load %arg14[%c15_122, %c0_123] : memref<16x32xf32, #tpu.memory_space<vmem>>, vector<1x32xf32>
    tpu.vector_store %arg14[%c15_122, %c0_123], %247 {strides = array<i32>} : memref<16x32xf32, #tpu.memory_space<vmem>>, vector<1x32xf32>,
    %c0_124 = arith.constant 0 : index
    %c0_125 = arith.constant 0 : index
    %249 = vector.load %arg11[%c0_124, %c0_125] : memref<2x32xf32, #tpu.memory_space<vmem>>, vector<2x32xf32>
    tpu.vector_store %arg11[%c0_124, %c0_125], %244 {strides = array<i32>} : memref<2x32xf32, #tpu.memory_space<vmem>>, vector<2x32xf32>,
    %c0_126 = arith.constant 0 : index
    %c0_127 = arith.constant 0 : index
    %250 = vector.load %arg12[%c0_126, %c0_127] : memref<2x32xf32, #tpu.memory_space<vmem>>, vector<2x32xf32>
    tpu.vector_store %arg12[%c0_126, %c0_127], %242 {strides = array<i32>} : memref<2x32xf32, #tpu.memory_space<vmem>>, vector<2x32xf32>,
    %c0_128 = arith.constant 0 : index
    %c0_129 = arith.constant 0 : index
    %251 = vector.load %arg14[%c0_128, %c0_129] : memref<16x32xf32, #tpu.memory_space<vmem>>, vector<16x32xf32>
    %c0_130 = arith.constant 0 : index
    %c0_131 = arith.constant 0 : index
    %252 = vector.load %arg8[%c0_130, %c0_131] : memref<32x16xf32, #tpu.memory_space<vmem>>, vector<32x16xf32>
    %cst_132 = arith.constant dense<0.000000e+00> : vector<16x16xf32>
    %253 = tpu.matmul %251, %252, %cst_132 {dimension_numbers = #tpu.dot_dimension_numbers<[1], [0], [0], [1], [0, 0, 1, 1], [], []>} : vector<16x32xf32>, vector<32x16xf32>, vector<16x16xf32> -> vector<16x16xf32>
    %c0_133 = arith.constant 0 : index
    %c0_134 = arith.constant 0 : index
    %254 = vector.load %arg9[%c0_133, %c0_134] : memref<1x16xf32, #tpu.memory_space<vmem>>, vector<1x16xf32>
    %255 = vector.broadcast %254 : vector<1x16xf32> to vector<16x16xf32>
    %256 = arith.addf %253, %255 : vector<16x16xf32>
    %c0_135 = arith.constant 0 : index
    %c0_136 = arith.constant 0 : index
    %257 = vector.load %arg10[%c0_135, %c0_136] : memref<16x16xf32, #tpu.memory_space<vmem>>, vector<16x16xf32>
    tpu.vector_store %arg10[%c0_135, %c0_136], %256 {strides = array<i32>} : memref<16x16xf32, #tpu.memory_space<vmem>>, vector<16x16xf32>,
    return
  }
  func.func @transform_0(%arg0: i32, %arg1: memref<2x8xi32, #tpu.memory_space<smem>>) -> (i32, i32) {
    %c0_i32 = arith.constant 0 : i32
    %c0_i32_0 = arith.constant 0 : i32
    %c0_i32_1 = arith.constant 0 : i32
    return %c0_i32, %c0_i32_0 : i32, i32
  }
  func.func @transform_1(%arg0: i32, %arg1: memref<2x8xi32, #tpu.memory_space<smem>>) -> (i32, i32) {
    %c0_i32 = arith.constant 0 : i32
    %c0_i32_0 = arith.constant 0 : i32
    %c0_i32_1 = arith.constant 0 : i32
    return %c0_i32, %c0_i32_0 : i32, i32
  }
  func.func @transform_2(%arg0: i32, %arg1: memref<2x8xi32, #tpu.memory_space<smem>>) -> (i32, i32) {
    %c0_i32 = arith.constant 0 : i32
    %c0_i32_0 = arith.constant 0 : i32
    %c0_i32_1 = arith.constant 0 : i32
    return %c0_i32, %c0_i32_0 : i32, i32
  }
  func.func @transform_3(%arg0: i32, %arg1: memref<2x8xi32, #tpu.memory_space<smem>>) -> (i32, i32) {
    %c0_i32 = arith.constant 0 : i32
    %c0_i32_0 = arith.constant 0 : i32
    %c0_i32_1 = arith.constant 0 : i32
    return %c0_i32, %c0_i32_0 : i32, i32
  }
  func.func @transform_4(%arg0: i32, %arg1: memref<2x8xi32, #tpu.memory_space<smem>>) -> (i32, i32) {
    %c0_i32 = arith.constant 0 : i32
    %c0_i32_0 = arith.constant 0 : i32
    %c0_i32_1 = arith.constant 0 : i32
    return %c0_i32, %c0_i32_0 : i32, i32
  }
  func.func @transform_5(%arg0: i32, %arg1: memref<2x8xi32, #tpu.memory_space<smem>>) -> (i32, i32) {
    %c0_i32 = arith.constant 0 : i32
    %c0_i32_0 = arith.constant 0 : i32
    %c0_i32_1 = arith.constant 0 : i32
    return %c0_i32, %c0_i32_0 : i32, i32
  }
  func.func @transform_6(%arg0: i32, %arg1: memref<2x8xi32, #tpu.memory_space<smem>>) -> (i32, i32) {
    %c0_i32 = arith.constant 0 : i32
    %c0_i32_0 = arith.constant 0 : i32
    %c0_i32_1 = arith.constant 0 : i32
    return %c0_i32, %c0_i32_0 : i32, i32
  }
  func.func @transform_7(%arg0: i32, %arg1: memref<2x8xi32, #tpu.memory_space<smem>>) -> (i32, i32) {
    %c0_i32 = arith.constant 0 : i32
    %c0_i32_0 = arith.constant 0 : i32
    %c0_i32_1 = arith.constant 0 : i32
    return %c0_i32, %c0_i32_0 : i32, i32
  }
  func.func @transform_8(%arg0: i32, %arg1: memref<2x8xi32, #tpu.memory_space<smem>>) -> (i32, i32) {
    %c0_i32 = arith.constant 0 : i32
    %c0_i32_0 = arith.constant 0 : i32
    %c0_i32_1 = arith.constant 0 : i32
    return %c0_i32, %c0_i32_0 : i32, i32
  }
  func.func @transform_9(%arg0: i32, %arg1: memref<2x8xi32, #tpu.memory_space<smem>>) -> (i32, i32) {
    %c0_i32 = arith.constant 0 : i32
    %c0_i32_0 = arith.constant 0 : i32
    %c0_i32_1 = arith.constant 0 : i32
    return %c0_i32, %c0_i32_0 : i32, i32
  }
  func.func @transform_10(%arg0: i32, %arg1: memref<2x8xi32, #tpu.memory_space<smem>>) -> (i32, i32) {
    %c0_i32 = arith.constant 0 : i32
    %c0_i32_0 = arith.constant 0 : i32
    %c0_i32_1 = arith.constant 0 : i32
    return %c0_i32, %c0_i32_0 : i32, i32
  }
}

</mosaic_0001>

<llo_original>
// kernel: tpu_custom_call.1
$region0: #{tpu_custom_call.1}
  #allocation0 [shape = 'u32[]', space=smem, size = 0x4, offset = 0x4, fixed_abs, tag = 'smem constant byte address 0x4 - core index']
  #allocation1 [shape = 'u32[72,128]{1,0:T(1,128)}', space=vmem, size = 0x9000, scoped, tag = 'internal scratch']
  #allocation2 [shape = 'f32[16,32]{1,0:T(8,128)}', space=vmem, size = 0x2000, scoped, tag = 'scratch operand']
  #allocation3 [shape = 'f32[16,32]{1,0:T(8,128)}', space=vmem, size = 0x2000, scoped, tag = 'scratch operand']
  #allocation4 [shape = 's32[1]{0}', space=sflag, size = 0x4, scoped, tag = 'scoped memory for tpu_custom_call.1']
  #allocation5 [shape = 'u8[1024]{0}', space=smem, size = 0x400, scoped, tag = 'prefetched SMEM operand 0']
  %s0 = inlined_call_operand.vmem [shape: s32[2,8], index: 0, kind: input, shape index: {}]
  %s1 = inlined_call_operand.vmem [shape: f32[16,32], index: 1, kind: input, shape index: {}]
  %s2 = inlined_call_operand.hbm [shape: f32[2,32], index: 2, kind: input, shape index: {}]
  %s3 = inlined_call_operand.hbm [shape: f32[2,32], index: 3, kind: input, shape index: {}]
  %s4 = inlined_call_operand.vmem [shape: f32[32,128], index: 4, kind: input, shape index: {}]
  %s5 = inlined_call_operand.hbm [shape: f32[32,128], index: 5, kind: input, shape index: {}]
  %s6 = inlined_call_operand.vmem [shape: f32[1,128], index: 6, kind: input, shape index: {}]
  %s7 = inlined_call_operand.vmem [shape: f32[32,16], index: 7, kind: input, shape index: {}]
  %s8 = inlined_call_operand.vmem [shape: f32[1,16], index: 8, kind: input, shape index: {}]
  %s9 = inlined_call_operand.hbm [shape: f32[16,16], index: 9, kind: output, shape index: {0}]
  %s10 = inlined_call_operand.hbm [shape: f32[2,32], index: 10, kind: output, shape index: {1}]
  %s11 = inlined_call_operand.hbm [shape: f32[2,32], index: 11, kind: output, shape index: {2}]
  %12 = xla_tuple %s9, %s10, %s11
  %s13 = sld [smem:[#allocation0]]
  $region70: #{tpu_custom_call.1} parent=0
    _
  %s15 = ssub.s32 1, %s13
  %s16 = scalar_select 0, %s15, %s13
  %s18 = sshll.u32 %s0, 4
  %s19 = int_to_ptr.vmem [resolvable:$true] %s18
  %21 = dma.vmem_to_smem %s19, 32, [#allocation5], [#allocation4]
  %23 = dma.done [#allocation4], 32
  %24 = sfence
  $region1: #{tpu_custom_call.1} parent=0
    #allocation6 [shape = 'u8[1024]{0}', space=vmem, size = 0x400, scoped, tag = 'input window, operand 2, single buffered']
    #allocation7 [shape = 's32[1]{0}', space=sflag, size = 0x4, scoped, tag = 'scoped memory for tpu_custom_call.1']
    #allocation8 [shape = 's32[1]{0}', space=sflag, size = 0x4, scoped, tag = 'scoped memory for tpu_custom_call.1']
    #allocation9 [shape = 'u8[1024]{0}', space=vmem, size = 0x400, scoped, tag = 'input window, operand 3, single buffered']
    #allocation10 [shape = 's32[1]{0}', space=sflag, size = 0x4, scoped, tag = 'scoped memory for tpu_custom_call.1']
    #allocation11 [shape = 'u8[16384]{0}', space=vmem, size = 0x4000, scoped, tag = 'input window, operand 5, single buffered']
    #allocation12 [shape = 'u8[8192]{0}', space=vmem, size = 0x2000, scoped, tag = 'output window, operand 0, single buffered']
    #allocation13 [shape = 'u8[1024]{0}', space=vmem, size = 0x400, scoped, tag = 'output window, operand 1, single buffered']
    #allocation14 [shape = 's32[1]{0}', space=sflag, size = 0x4, scoped, tag = 'scoped memory for tpu_custom_call.1']
    #allocation15 [shape = 'u8[1024]{0}', space=vmem, size = 0x400, scoped, tag = 'output window, operand 2, single buffered']
    %25 = vsyncpa [#allocation7], 0
    %26 = vsyncpa [#allocation10], 0
    %27 = vsyncpa [#allocation8], 0
    %28 = vsyncpa [#allocation14], 0
    // Predicated region
    $region2: #{tpu_custom_call.1} parent=1 // pred_check
      _
    $region3: #{tpu_custom_call.1} parent=1 // pred_check_branch
      %30 = sbr.rel (0) target = $region5
    $region4: #{tpu_custom_call.1} parent=1 // pred_region
      _
    $region5: #{tpu_custom_call.1} parent=1 // pred_fallthru
      _
    // Predicated region
    $region6: #{tpu_custom_call.1} parent=1 // pred_check
      _
    $region7: #{tpu_custom_call.1} parent=1 // pred_check_branch
      %32 = sbr.rel (0) target = $region9
    $region8: #{tpu_custom_call.1} parent=1 // pred_region
      %34 = vsyncadd [#allocation7], 0
      %s36 = sshll.u32 %s2, 4
      %s37 = int_to_ptr.hbm [resolvable:$true] %s36
      %s38 = sshll.u32 [#allocation6], 4
      %s39 = int_to_ptr.vmem [resolvable:$true] %s38
      %41 = dma.hbm_to_vmem [thread:$0]  %s37, 32, %s39, [#allocation7]
    $region9: #{tpu_custom_call.1} parent=1 // pred_fallthru
      _
    // Predicated region
    $region10: #{tpu_custom_call.1} parent=1 // pred_check
      _
    $region11: #{tpu_custom_call.1} parent=1 // pred_check_branch
      %43 = sbr.rel (0) target = $region13
    $region12: #{tpu_custom_call.1} parent=1 // pred_region
      %45 = vsyncadd [#allocation10], 0
      %s47 = sshll.u32 %s3, 4
      %s48 = int_to_ptr.hbm [resolvable:$true] %s47
      %s49 = sshll.u32 [#allocation9], 4
      %s50 = int_to_ptr.vmem [resolvable:$true] %s49
      %52 = dma.hbm_to_vmem [thread:$0]  %s48, 32, %s50, [#allocation10]
    $region13: #{tpu_custom_call.1} parent=1 // pred_fallthru
      _
    // Predicated region
    $region14: #{tpu_custom_call.1} parent=1 // pred_check
      _
    $region15: #{tpu_custom_call.1} parent=1 // pred_check_branch
      %54 = sbr.rel (0) target = $region17
    $region16: #{tpu_custom_call.1} parent=1 // pred_region
      _
    $region17: #{tpu_custom_call.1} parent=1 // pred_fallthru
      _
    // Predicated region
    $region18: #{tpu_custom_call.1} parent=1 // pred_check
      _
    $region19: #{tpu_custom_call.1} parent=1 // pred_check_branch
      %56 = sbr.rel (0) target = $region21
    $region20: #{tpu_custom_call.1} parent=1 // pred_region
      %58 = vsyncadd [#allocation10], 0
      %s59 = sshll.u32 %s5, 4
      %s60 = int_to_ptr.hbm [resolvable:$true] %s59
      %s61 = sshll.u32 [#allocation11], 4
      %s62 = int_to_ptr.vmem [resolvable:$true] %s61
      %67 = dma.hbm_to_vmem [thread:$0]  %s60, 512, %s62, [#allocation10], 128, 128, 8
    $region21: #{tpu_custom_call.1} parent=1 // pred_fallthru
      _
    // Predicated region
    $region22: #{tpu_custom_call.1} parent=1 // pred_check
      _
    $region23: #{tpu_custom_call.1} parent=1 // pred_check_branch
      %69 = sbr.rel (0) target = $region25
    $region24: #{tpu_custom_call.1} parent=1 // pred_region
      _
    $region25: #{tpu_custom_call.1} parent=1 // pred_fallthru
      _
    // Predicated region
    $region26: #{tpu_custom_call.1} parent=1 // pred_check
      _
    $region27: #{tpu_custom_call.1} parent=1 // pred_check_branch
      %71 = sbr.rel (0) target = $region29
    $region28: #{tpu_custom_call.1} parent=1 // pred_region
      _
    $region29: #{tpu_custom_call.1} parent=1 // pred_fallthru
      _
    // Predicated region
    $region30: #{tpu_custom_call.1} parent=1 // pred_check
      _
    $region31: #{tpu_custom_call.1} parent=1 // pred_check_branch
      %73 = sbr.rel (0) target = $region33
    $region32: #{tpu_custom_call.1} parent=1 // pred_region
      _
    $region33: #{tpu_custom_call.1} parent=1 // pred_fallthru
      _
    // Predicated region
    $region34: #{tpu_custom_call.1} parent=1 // pred_check
      _
    $region35: #{tpu_custom_call.1} parent=1 // pred_check_branch
      %75 = sbr.rel (0) target = $region37
    $region36: #{tpu_custom_call.1} parent=1 // pred_region
      %77 = dma.done [#allocation7], 32
    $region37: #{tpu_custom_call.1} parent=1 // pred_fallthru
      _
    // Predicated region
    $region38: #{tpu_custom_call.1} parent=1 // pred_check
      _
    $region39: #{tpu_custom_call.1} parent=1 // pred_check_branch
      %79 = sbr.rel (0) target = $region41
    $region40: #{tpu_custom_call.1} parent=1 // pred_region
      %81 = dma.done [#allocation10], 32
    $region41: #{tpu_custom_call.1} parent=1 // pred_fallthru
      _
    // Predicated region
    $region42: #{tpu_custom_call.1} parent=1 // pred_check
      _
    $region43: #{tpu_custom_call.1} parent=1 // pred_check_branch
      %83 = sbr.rel (0) target = $region45
    $region44: #{tpu_custom_call.1} parent=1 // pred_region
      %85 = dma.done [#allocation10], 512
    $region45: #{tpu_custom_call.1} parent=1 // pred_fallthru
      _
    %s86 = sld [smem:[#allocation5]]
    %s87 = scalar_lea.vmem %s1, %s86
    %v88 = vld [vmem:[%s87] sm:$0x1]
    %vm89 = vcmask 253952
    %90 = vst.msk [vmem:[#allocation2] sm:$0x1] %vm89, %v88
    %s91 = sld [smem:[#allocation5 + $0x80]]
    %s92 = scalar_lea.vmem %s1, %s91
    %v93 = vld [vmem:[%s92] sm:$0x1]
    %94 = vst.msk [vmem:[#allocation2 + $0x1] sm:$0x1] %vm89, %v93
    %s95 = sld [smem:[#allocation5 + $0x1]]
    %s96 = scalar_lea.vmem %s1, %s95
    %v97 = vld [vmem:[%s96] sm:$0x1]
    %98 = vst.msk [vmem:[#allocation2 + $0x2] sm:$0x1] %vm89, %v97
    %s99 = sld [smem:[#allocation5 + $0x81]]
    %s100 = scalar_lea.vmem %s1, %s99
    %v101 = vld [vmem:[%s100] sm:$0x1]
    %102 = vst.msk [vmem:[#allocation2 + $0x3] sm:$0x1] %vm89, %v101
    %s103 = sld [smem:[#allocation5 + $0x2]]
    %s104 = scalar_lea.vmem %s1, %s103
    %v105 = vld [vmem:[%s104] sm:$0x1]
    %106 = vst.msk [vmem:[#allocation2 + $0x4] sm:$0x1] %vm89, %v105
    %s107 = sld [smem:[#allocation5 + $0x82]]
    %s108 = scalar_lea.vmem %s1, %s107
    %v109 = vld [vmem:[%s108] sm:$0x1]
    %110 = vst.msk [vmem:[#allocation2 + $0x5] sm:$0x1] %vm89, %v109
    %s111 = sld [smem:[#allocation5 + $0x3]]
    %s112 = scalar_lea.vmem %s1, %s111
    %v113 = vld [vmem:[%s112] sm:$0x1]
    %114 = vst.msk [vmem:[#allocation2 + $0x6] sm:$0x1] %vm89, %v113
    %s115 = sld [smem:[#allocation5 + $0x83]]
    %s116 = scalar_lea.vmem %s1, %s115
    %v117 = vld [vmem:[%s116] sm:$0x1]
    %118 = vst.msk [vmem:[#allocation2 + $0x7] sm:$0x1] %vm89, %v117
    %s119 = sld [smem:[#allocation5 + $0x4]]
    %s120 = scalar_lea.vmem %s1, %s119
    %v121 = vld [vmem:[%s120] sm:$0x1]
    %122 = vst.msk [vmem:[#allocation2 + $0x8] sm:$0x1] %vm89, %v121
    %s123 = sld [smem:[#allocation5 + $0x84]]
    %s124 = scalar_lea.vmem %s1, %s123
    %v125 = vld [vmem:[%s124] sm:$0x1]
    %126 = vst.msk [vmem:[#allocation2 + $0x9] sm:$0x1] %vm89, %v125
    %s127 = sld [smem:[#allocation5 + $0x5]]
    %s128 = scalar_lea.vmem %s1, %s127
    %v129 = vld [vmem:[%s128] sm:$0x1]
    %130 = vst.msk [vmem:[#allocation2 + $0xa] sm:$0x1] %vm89, %v129
    %s131 = sld [smem:[#allocation5 + $0x85]]
    %s132 = scalar_lea.vmem %s1, %s131
    %v133 = vld [vmem:[%s132] sm:$0x1]
    %134 = vst.msk [vmem:[#allocation2 + $0xb] sm:$0x1] %vm89, %v133
    %s135 = sld [smem:[#allocation5 + $0x6]]
    %s136 = scalar_lea.vmem %s1, %s135
    %v137 = vld [vmem:[%s136] sm:$0x1]
    %138 = vst.msk [vmem:[#allocation2 + $0xc] sm:$0x1] %vm89, %v137
    %s139 = sld [smem:[#allocation5 + $0x86]]
    %s140 = scalar_lea.vmem %s1, %s139
    %v141 = vld [vmem:[%s140] sm:$0x1]
    %142 = vst.msk [vmem:[#allocation2 + $0xd] sm:$0x1] %vm89, %v141
    %s143 = sld [smem:[#allocation5 + $0x7]]
    %s144 = scalar_lea.vmem %s1, %s143
    %v145 = vld [vmem:[%s144] sm:$0x1]
    %146 = vst.msk [vmem:[#allocation2 + $0xe] sm:$0x1] %vm89, %v145
    %s147 = sld [smem:[#allocation5 + $0x87]]
    %s148 = scalar_lea.vmem %s1, %s147
    %v149 = vld [vmem:[%s148] sm:$0x1]
    %150 = vst.msk [vmem:[#allocation2 + $0xf] sm:$0x1] %vm89, %v149
    %v151 = vld [vmem:[#allocation2] sm:$0xff]
    %v152 = vld [vmem:[#allocation2 + $0x8] sm:$0xff]
    %v153 = vld [vmem:[%s4] sm:$0xff]
    %v154 = vld [vmem:[%s4 + $0x8] sm:$0xff]
    %v155 = vld [vmem:[%s4 + $0x10] sm:$0xff]
    %v156 = vld [vmem:[%s4 + $0x18] sm:$0xff]
    %v157 = vld [vmem:[%s6] sm:$0x1]
    %v159 = vperm.slane %v157, 0
    %vm161 = vcmask 261120
    %v163 = vsel %vm161, %v151, 0
    %v166 = vsel %vm161, %v152, 0
    %168 = vmatpush.msra.mxu0 0.0
    %169 = vmatpush.msra.mxu0 0.0
    %170 = vmatpush.msra.mxu0 0.0
    %171 = vmatpush.msra.mxu0 0.0
    %172 = vmatpush.msra.mxu0 0.0
    %173 = vmatpush.msra.mxu0 0.0
    %174 = vmatpush.msra.mxu0 0.0
    %175 = vmatpush.msra.mxu0 0.0
    %176 = vmatpush.msra.mxu0 0.0
    %177 = vmatpush.msra.mxu0 0.0
    %178 = vmatpush.msra.mxu0 0.0
    %179 = vmatpush.msra.mxu0 0.0
    %180 = vmatpush.msra.mxu0 %v156
    %181 = vmatpush.msra.mxu0 %v155
    %182 = vmatpush.msra.mxu0 %v154
    %183 = vmatpush.msra.mxu0 %v153
    %184 = vmatmul.f32.gmra.mxu0 %v163
    %v185 = vpop.f32.mrf.mxu0
    %v186 = vadd.f32 %v159, %v185
    %187 = vmatmul.f32.gmra.mxu0 %v166
    %v188 = vpop.f32.mrf.mxu0
    %v189 = vadd.f32 %v159, %v188
    %190 = vdwg.mxu0
    %v191 = vld [vmem:[#allocation11] sm:$0xff]
    %v192 = vld [vmem:[#allocation11 + $0x8] sm:$0xff]
    %v193 = vld [vmem:[#allocation11 + $0x10] sm:$0xff]
    %v194 = vld [vmem:[#allocation11 + $0x18] sm:$0xff]
    %v195 = vld [vmem:[#allocation6] sm:$0x3]
    %v196 = vld [vmem:[#allocation9] sm:$0x3]
    %v198 = vsel %vm161, %v195, 0
    %200 = vmatpush.msra.mxu0 0.0
    %201 = vmatpush.msra.mxu0 0.0
    %202 = vmatpush.msra.mxu0 0.0
    %203 = vmatpush.msra.mxu0 0.0
    %204 = vmatpush.msra.mxu0 0.0
    %205 = vmatpush.msra.mxu0 0.0
    %206 = vmatpush.msra.mxu0 0.0
    %207 = vmatpush.msra.mxu0 0.0
    %208 = vmatpush.msra.mxu0 0.0
    %209 = vmatpush.msra.mxu0 0.0
    %210 = vmatpush.msra.mxu0 0.0
    %211 = vmatpush.msra.mxu0 0.0
    %212 = vmatpush.msra.mxu0 %v194
    %213 = vmatpush.msra.mxu0 %v193
    %214 = vmatpush.msra.mxu0 %v192
    %215 = vmatpush.msra.mxu0 %v191
    %216 = vmatmul.f32.gmra.mxu0 %v198
    %v217 = vpop.f32.mrf.mxu0
    %v218 = vadd.f32 0.0, %v217
    %219 = vdwg.mxu0
    %v220 = vadd.f32 %v186, %v218
    %v221 = vxor.u32 %v220, 2147483648
    %v222 = vmul.f32 %v221, 1.442695
    %v223 = vpow.pop %v222
    %v224 = vadd.f32 %v223, 1.0
    %v225 = vrcp.pop %v224
    %v226 = vmul.f32 %v224, %v225
    %v227 = vsub.f32 1.0, %v226
    %v228 = vmul.f32 %v225, %v227
    %v229 = vadd.f32 %v225, %v228
    %vm230 = vweird.f32 %v224
    %vm231 = vweird.f32 %v225
    %vm232 = vmor %vm230, %vm231
    %v233 = vsel %vm232, %v225, %v229
    %v234 = vand.u32 2147483647, %v224
    %vm235 = vcmp.eq.f32.partialorder %v234, 8.507059e+37
    %v236 = vand.u32 %v224, 2147483648
    %v237 = vor.u32 1.1754944e-38, %v236
    %v238 = vsel %vm235, %v237, %v233
    %v239 = vmul.f32 1.0, %v238
    %v240 = vtanh.pop %v220
    %242 = vrot.lane.b32.xlu0 %v196, 32
    %v243 = vpop.permute.xlu0 %242
    %v245 = vmul.f32 %v239, %v243
    %247 = vrot.lane.b32.xlu0 %v240, 64
    %v248 = vpop.permute.xlu0 %247
    %v250 = vmul.f32 %v239, %v248
    %252 = vrot.lane.b32.xlu0 %v250, 32
    %v253 = vpop.permute.xlu0 %252
    %v255 = vadd.f32 %v245, %v253
    %v256 = vtanh.pop %v255
    %258 = vrot.lane.b32.xlu0 %v256, 64
    %v259 = vpop.permute.xlu0 %258
    %v261 = vmul.f32 %v239, %v259
    %263 = vrot.lane.b32.xlu0 %v261, 32
    %v264 = vpop.permute.xlu0 %263
    %266 = vst.msk [vmem:[#allocation3] sm:$0x1] %vm89, %v264
    %vm267 = vcmask 254977
    %268 = vst.msk [vmem:[#allocation3 + $0x7] sm:$0x2] %vm267, %v264
    %v269 = vsel %vm161, %v264, 0
    %271 = vmatpush.msra.mxu0 0.0
    %272 = vmatpush.msra.mxu0 0.0
    %273 = vmatpush.msra.mxu0 0.0
    %274 = vmatpush.msra.mxu0 0.0
    %275 = vmatpush.msra.mxu0 0.0
    %276 = vmatpush.msra.mxu0 0.0
    %277 = vmatpush.msra.mxu0 0.0
    %278 = vmatpush.msra.mxu0 0.0
    %279 = vmatpush.msra.mxu0 0.0
    %280 = vmatpush.msra.mxu0 0.0
    %281 = vmatpush.msra.mxu0 0.0
    %282 = vmatpush.msra.mxu0 0.0
    %283 = vmatpush.msra.mxu0 %v194
    %284 = vmatpush.msra.mxu0 %v193
    %285 = vmatpush.msra.mxu0 %v192
    %286 = vmatpush.msra.mxu0 %v191
    %287 = vmatmul.f32.gmra.mxu0 %v269
    %v288 = vpop.f32.mrf.mxu0
    %v289 = vadd.f32 0.0, %v288
    %290 = vdwg.mxu0
    %v292 = vrot.slane %v289, 6
    %v294 = vadd.f32 %v186, %v292
    %v295 = vxor.u32 %v294, 2147483648
    %v296 = vmul.f32 %v295, 1.442695
    %v297 = vpow.pop %v296
    %v298 = vadd.f32 %v297, 1.0
    %v299 = vrcp.pop %v298
    %v300 = vmul.f32 %v298, %v299
    %v301 = vsub.f32 1.0, %v300
    %v302 = vmul.f32 %v299, %v301
    %v303 = vadd.f32 %v299, %v302
    %vm304 = vweird.f32 %v298
    %vm305 = vweird.f32 %v299
    %vm306 = vmor %vm304, %vm305
    %v307 = vsel %vm306, %v299, %v303
    %v308 = vand.u32 2147483647, %v298
    %vm309 = vcmp.eq.f32.partialorder %v308, 8.507059e+37
    %v310 = vand.u32 %v298, 2147483648
    %v311 = vor.u32 1.1754944e-38, %v310
    %v312 = vsel %vm309, %v311, %v307
    %v313 = vmul.f32 1.0, %v312
    %v314 = vtanh.pop %v294
    %v316 = vrot.slane %v255, 6
    %v318 = vmul.f32 %v313, %v316
    %320 = vrot.lane.b32.xlu0 %v314, 64
    %v321 = vpop.permute.xlu0 %320
    %v323 = vmul.f32 %v313, %v321
    %325 = vrot.lane.b32.xlu0 %v323, 32
    %v326 = vpop.permute.xlu0 %325
    %v328 = vadd.f32 %v318, %v326
    %v329 = vtanh.pop %v328
    %331 = vrot.lane.b32.xlu0 %v329, 64
    %v332 = vpop.permute.xlu0 %331
    %v334 = vmul.f32 %v313, %v332
    %336 = vrot.lane.b32.xlu0 %v334, 32
    %v337 = vpop.permute.xlu0 %336
    %vm339 = vcmask 256002
    %340 = vst.msk [vmem:[#allocation3 - $0x1] sm:$0x4] %vm339, %v337
    %vm341 = vcmask 257027
    %342 = vst.msk [vmem:[#allocation3 + $0x6] sm:$0x8] %vm341, %v337
    %v343 = vrot.slane %v334, 2
    %344 = vrot.lane.b32.xlu0 %v343, 32
    %v345 = vpop.permute.xlu0 %344
    %v346 = vsel %vm161, %v345, 0
    %348 = vmatpush.msra.mxu0 0.0
    %349 = vmatpush.msra.mxu0 0.0
    %350 = vmatpush.msra.mxu0 0.0
    %351 = vmatpush.msra.mxu0 0.0
    %352 = vmatpush.msra.mxu0 0.0
    %353 = vmatpush.msra.mxu0 0.0
    %354 = vmatpush.msra.mxu0 0.0
    %355 = vmatpush.msra.mxu0 0.0
    %356 = vmatpush.msra.mxu0 0.0
    %357 = vmatpush.msra.mxu0 0.0
    %358 = vmatpush.msra.mxu0 0.0
    %359 = vmatpush.msra.mxu0 0.0
    %360 = vmatpush.msra.mxu0 %v194
    %361 = vmatpush.msra.mxu0 %v193
    %362 = vmatpush.msra.mxu0 %v192
    %363 = vmatpush.msra.mxu0 %v191
    %364 = vmatmul.f32.gmra.mxu0 %v346
    %v365 = vpop.f32.mrf.mxu0
    %v366 = vadd.f32 0.0, %v365
    %367 = vdwg.mxu0
    %v369 = vrot.slane %v366, 4
    %v371 = vadd.f32 %v186, %v369
    %v372 = vxor.u32 %v371, 2147483648
    %v373 = vmul.f32 %v372, 1.442695
    %v374 = vpow.pop %v373
    %v375 = vadd.f32 %v374, 1.0
    %v376 = vrcp.pop %v375
    %v377 = vmul.f32 %v375, %v376
    %v378 = vsub.f32 1.0, %v377
    %v379 = vmul.f32 %v376, %v378
    %v380 = vadd.f32 %v376, %v379
    %vm381 = vweird.f32 %v375
    %vm382 = vweird.f32 %v376
    %vm383 = vmor %vm381, %vm382
    %v384 = vsel %vm383, %v376, %v380
    %v385 = vand.u32 2147483647, %v375
    %vm386 = vcmp.eq.f32.partialorder %v385, 8.507059e+37
    %v387 = vand.u32 %v375, 2147483648
    %v388 = vor.u32 1.1754944e-38, %v387
    %v389 = vsel %vm386, %v388, %v384
    %v390 = vmul.f32 1.0, %v389
    %v391 = vtanh.pop %v371
    %v393 = vrot.slane %v328, 6
    %v395 = vmul.f32 %v390, %v393
    %397 = vrot.lane.b32.xlu0 %v391, 64
    %v398 = vpop.permute.xlu0 %397
    %v400 = vmul.f32 %v390, %v398
    %402 = vrot.lane.b32.xlu0 %v400, 32
    %v403 = vpop.permute.xlu0 %402
    %v405 = vadd.f32 %v395, %v403
    %v406 = vtanh.pop %v405
    %408 = vrot.lane.b32.xlu0 %v406, 64
    %v409 = vpop.permute.xlu0 %408
    %v411 = vmul.f32 %v390, %v409
    %413 = vrot.lane.b32.xlu0 %v411, 32
    %v414 = vpop.permute.xlu0 %413
    %vm416 = vcmask 258052
    %417 = vst.msk [vmem:[#allocation3 - $0x2] sm:$0x10] %vm416, %v414
    %vm418 = vcmask 259077
    %419 = vst.msk [vmem:[#allocation3 + $0x5] sm:$0x20] %vm418, %v414
    %v420 = vrot.slane %v411, 4
    %421 = vrot.lane.b32.xlu0 %v420, 32
    %v422 = vpop.permute.xlu0 %421
    %v423 = vsel %vm161, %v422, 0
    %425 = vmatpush.msra.mxu0 0.0
    %426 = vmatpush.msra.mxu0 0.0
    %427 = vmatpush.msra.mxu0 0.0
    %428 = vmatpush.msra.mxu0 0.0
    %429 = vmatpush.msra.mxu0 0.0
    %430 = vmatpush.msra.mxu0 0.0
    %431 = vmatpush.msra.mxu0 0.0
    %432 = vmatpush.msra.mxu0 0.0
    %433 = vmatpush.msra.mxu0 0.0
    %434 = vmatpush.msra.mxu0 0.0
    %435 = vmatpush.msra.mxu0 0.0
    %436 = vmatpush.msra.mxu0 0.0
    %437 = vmatpush.msra.mxu0 %v194
    %438 = vmatpush.msra.mxu0 %v193
    %439 = vmatpush.msra.mxu0 %v192
    %440 = vmatpush.msra.mxu0 %v191
    %441 = vmatmul.f32.gmra.mxu0 %v423
    %v442 = vpop.f32.mrf.mxu0
    %v443 = vadd.f32 0.0, %v442
    %444 = vdwg.mxu0
    %v446 = vrot.slane %v443, 2
    %v448 = vadd.f32 %v186, %v446
    %v449 = vxor.u32 %v448, 2147483648
    %v450 = vmul.f32 %v449, 1.442695
    %v451 = vpow.pop %v450
    %v452 = vadd.f32 %v451, 1.0
    %v453 = vrcp.pop %v452
    %v454 = vmul.f32 %v452, %v453
    %v455 = vsub.f32 1.0, %v454
    %v456 = vmul.f32 %v453, %v455
    %v457 = vadd.f32 %v453, %v456
    %vm458 = vweird.f32 %v452
    %vm459 = vweird.f32 %v453
    %vm460 = vmor %vm458, %vm459
    %v461 = vsel %vm460, %v453, %v457
    %v462 = vand.u32 2147483647, %v452
    %vm463 = vcmp.eq.f32.partialorder %v462, 8.507059e+37
    %v464 = vand.u32 %v452, 2147483648
    %v465 = vor.u32 1.1754944e-38, %v464
    %v466 = vsel %vm463, %v465, %v461
    %v467 = vmul.f32 1.0, %v466
    %v468 = vtanh.pop %v448
    %v470 = vrot.slane %v405, 6
    %v472 = vmul.f32 %v467, %v470
    %474 = vrot.lane.b32.xlu0 %v468, 64
    %v475 = vpop.permute.xlu0 %474
    %v477 = vmul.f32 %v467, %v475
    %479 = vrot.lane.b32.xlu0 %v477, 32
    %v480 = vpop.permute.xlu0 %479
    %v482 = vadd.f32 %v472, %v480
    %v483 = vtanh.pop %v482
    %485 = vrot.lane.b32.xlu0 %v483, 64
    %v486 = vpop.permute.xlu0 %485
    %v488 = vmul.f32 %v467, %v486
    %490 = vrot.lane.b32.xlu0 %v488, 32
    %v491 = vpop.permute.xlu0 %490
    %vm493 = vcmask 260102
    %494 = vst.msk [vmem:[#allocation3 - $0x3] sm:$0x40] %vm493, %v491
    %vm495 = vcmask 261127
    %496 = vst.msk [vmem:[#allocation3 + $0x4] sm:$0x80] %vm495, %v491
    %v497 = vrot.slane %v488, 6
    %498 = vrot.lane.b32.xlu0 %v497, 32
    %v499 = vpop.permute.xlu0 %498
    %v500 = vsel %vm161, %v499, 0
    %502 = vmatpush.msra.mxu0 0.0
    %503 = vmatpush.msra.mxu0 0.0
    %504 = vmatpush.msra.mxu0 0.0
    %505 = vmatpush.msra.mxu0 0.0
    %506 = vmatpush.msra.mxu0 0.0
    %507 = vmatpush.msra.mxu0 0.0
    %508 = vmatpush.msra.mxu0 0.0
    %509 = vmatpush.msra.mxu0 0.0
    %510 = vmatpush.msra.mxu0 0.0
    %511 = vmatpush.msra.mxu0 0.0
    %512 = vmatpush.msra.mxu0 0.0
    %513 = vmatpush.msra.mxu0 0.0
    %514 = vmatpush.msra.mxu0 %v194
    %515 = vmatpush.msra.mxu0 %v193
    %516 = vmatpush.msra.mxu0 %v192
    %517 = vmatpush.msra.mxu0 %v191
    %518 = vmatmul.f32.gmra.mxu0 %v500
    %v519 = vpop.f32.mrf.mxu0
    %v520 = vadd.f32 0.0, %v519
    %521 = vdwg.mxu0
    %v522 = vadd.f32 %v189, %v520
    %v523 = vxor.u32 %v522, 2147483648
    %v524 = vmul.f32 %v523, 1.442695
    %v525 = vpow.pop %v524
    %v526 = vadd.f32 %v525, 1.0
    %v527 = vrcp.pop %v526
    %v528 = vmul.f32 %v526, %v527
    %v529 = vsub.f32 1.0, %v528
    %v530 = vmul.f32 %v527, %v529
    %v531 = vadd.f32 %v527, %v530
    %vm532 = vweird.f32 %v526
    %vm533 = vweird.f32 %v527
    %vm534 = vmor %vm532, %vm533
    %v535 = vsel %vm534, %v527, %v531
    %v536 = vand.u32 2147483647, %v526
    %vm537 = vcmp.eq.f32.partialorder %v536, 8.507059e+37
    %v538 = vand.u32 %v526, 2147483648
    %v539 = vor.u32 1.1754944e-38, %v538
    %v540 = vsel %vm537, %v539, %v535
    %v541 = vmul.f32 1.0, %v540
    %v542 = vtanh.pop %v522
    %v544 = vrot.slane %v482, 6
    %v546 = vmul.f32 %v541, %v544
    %548 = vrot.lane.b32.xlu0 %v542, 64
    %v549 = vpop.permute.xlu0 %548
    %v551 = vmul.f32 %v541, %v549
    %553 = vrot.lane.b32.xlu0 %v551, 32
    %v554 = vpop.permute.xlu0 %553
    %v556 = vadd.f32 %v546, %v554
    %v557 = vtanh.pop %v556
    %559 = vrot.lane.b32.xlu0 %v557, 64
    %v560 = vpop.permute.xlu0 %559
    %v562 = vmul.f32 %v541, %v560
    %564 = vrot.lane.b32.xlu0 %v562, 32
    %v565 = vpop.permute.xlu0 %564
    %567 = vst.msk [vmem:[#allocation3 + $0x4] sm:$0x1] %vm89, %v565
    %568 = vst.msk [vmem:[#allocation3 + $0xb] sm:$0x2] %vm267, %v565
    %v569 = vsel %vm161, %v565, 0
    %571 = vmatpush.msra.mxu0 0.0
    %572 = vmatpush.msra.mxu0 0.0
    %573 = vmatpush.msra.mxu0 0.0
    %574 = vmatpush.msra.mxu0 0.0
    %575 = vmatpush.msra.mxu0 0.0
    %576 = vmatpush.msra.mxu0 0.0
    %577 = vmatpush.msra.mxu0 0.0
    %578 = vmatpush.msra.mxu0 0.0
    %579 = vmatpush.msra.mxu0 0.0
    %580 = vmatpush.msra.mxu0 0.0
    %581 = vmatpush.msra.mxu0 0.0
    %582 = vmatpush.msra.mxu0 0.0
    %583 = vmatpush.msra.mxu0 %v194
    %584 = vmatpush.msra.mxu0 %v193
    %585 = vmatpush.msra.mxu0 %v192
    %586 = vmatpush.msra.mxu0 %v191
    %587 = vmatmul.f32.gmra.mxu0 %v569
    %v588 = vpop.f32.mrf.mxu0
    %v589 = vadd.f32 0.0, %v588
    %590 = vdwg.mxu0
    %v592 = vrot.slane %v589, 6
    %v594 = vadd.f32 %v189, %v592
    %v595 = vxor.u32 %v594, 2147483648
    %v596 = vmul.f32 %v595, 1.442695
    %v597 = vpow.pop %v596
    %v598 = vadd.f32 %v597, 1.0
    %v599 = vrcp.pop %v598
    %v600 = vmul.f32 %v598, %v599
    %v601 = vsub.f32 1.0, %v600
    %v602 = vmul.f32 %v599, %v601
    %v603 = vadd.f32 %v599, %v602
    %vm604 = vweird.f32 %v598
    %vm605 = vweird.f32 %v599
    %vm606 = vmor %vm604, %vm605
    %v607 = vsel %vm606, %v599, %v603
    %v608 = vand.u32 2147483647, %v598
    %vm609 = vcmp.eq.f32.partialorder %v608, 8.507059e+37
    %v610 = vand.u32 %v598, 2147483648
    %v611 = vor.u32 1.1754944e-38, %v610
    %v612 = vsel %vm609, %v611, %v607
    %v613 = vmul.f32 1.0, %v612
    %v614 = vtanh.pop %v594
    %v616 = vrot.slane %v556, 6
    %v618 = vmul.f32 %v613, %v616
    %620 = vrot.lane.b32.xlu0 %v614, 64
    %v621 = vpop.permute.xlu0 %620
    %v623 = vmul.f32 %v613, %v621
    %625 = vrot.lane.b32.xlu0 %v623, 32
    %v626 = vpop.permute.xlu0 %625
    %v628 = vadd.f32 %v618, %v626
    %v629 = vtanh.pop %v628
    %631 = vrot.lane.b32.xlu0 %v629, 64
    %v632 = vpop.permute.xlu0 %631
    %v634 = vmul.f32 %v613, %v632
    %636 = vrot.lane.b32.xlu0 %v634, 32
    %v637 = vpop.permute.xlu0 %636
    %639 = vst.msk [vmem:[#allocation3 + $0x3] sm:$0x4] %vm339, %v637
    %640 = vst.msk [vmem:[#allocation3 + $0xa] sm:$0x8] %vm341, %v637
    %v641 = vrot.slane %v634, 2
    %642 = vrot.lane.b32.xlu0 %v641, 32
    %v643 = vpop.permute.xlu0 %642
    %v644 = vsel %vm161, %v643, 0
    %646 = vmatpush.msra.mxu0 0.0
    %647 = vmatpush.msra.mxu0 0.0
    %648 = vmatpush.msra.mxu0 0.0
    %649 = vmatpush.msra.mxu0 0.0
    %650 = vmatpush.msra.mxu0 0.0
    %651 = vmatpush.msra.mxu0 0.0
    %652 = vmatpush.msra.mxu0 0.0
    %653 = vmatpush.msra.mxu0 0.0
    %654 = vmatpush.msra.mxu0 0.0
    %655 = vmatpush.msra.mxu0 0.0
    %656 = vmatpush.msra.mxu0 0.0
    %657 = vmatpush.msra.mxu0 0.0
    %658 = vmatpush.msra.mxu0 %v194
    %659 = vmatpush.msra.mxu0 %v193
    %660 = vmatpush.msra.mxu0 %v192
    %661 = vmatpush.msra.mxu0 %v191
    %662 = vmatmul.f32.gmra.mxu0 %v644
    %v663 = vpop.f32.mrf.mxu0
    %v664 = vadd.f32 0.0, %v663
    %665 = vdwg.mxu0
    %v667 = vrot.slane %v664, 4
    %v669 = vadd.f32 %v189, %v667
    %v670 = vxor.u32 %v669, 2147483648
    %v671 = vmul.f32 %v670, 1.442695
    %v672 = vpow.pop %v671
    %v673 = vadd.f32 %v672, 1.0
    %v674 = vrcp.pop %v673
    %v675 = vmul.f32 %v673, %v674
    %v676 = vsub.f32 1.0, %v675
    %v677 = vmul.f32 %v674, %v676
    %v678 = vadd.f32 %v674, %v677
    %vm679 = vweird.f32 %v673
    %vm680 = vweird.f32 %v674
    %vm681 = vmor %vm679, %vm680
    %v682 = vsel %vm681, %v674, %v678
    %v683 = vand.u32 2147483647, %v673
    %vm684 = vcmp.eq.f32.partialorder %v683, 8.507059e+37
    %v685 = vand.u32 %v673, 2147483648
    %v686 = vor.u32 1.1754944e-38, %v685
    %v687 = vsel %vm684, %v686, %v682
    %v688 = vmul.f32 1.0, %v687
    %v689 = vtanh.pop %v669
    %v691 = vrot.slane %v628, 6
    %v693 = vmul.f32 %v688, %v691
    %695 = vrot.lane.b32.xlu0 %v689, 64
    %v696 = vpop.permute.xlu0 %695
    %v698 = vmul.f32 %v688, %v696
    %700 = vrot.lane.b32.xlu0 %v698, 32
    %v701 = vpop.permute.xlu0 %700
    %v703 = vadd.f32 %v693, %v701
    %v704 = vtanh.pop %v703
    %706 = vrot.lane.b32.xlu0 %v704, 64
    %v707 = vpop.permute.xlu0 %706
    %v709 = vmul.f32 %v688, %v707
    %711 = vrot.lane.b32.xlu0 %v709, 32
    %v712 = vpop.permute.xlu0 %711
    %714 = vst.msk [vmem:[#allocation3 + $0x2] sm:$0x10] %vm416, %v712
    %715 = vst.msk [vmem:[#allocation3 + $0x9] sm:$0x20] %vm418, %v712
    %v716 = vrot.slane %v709, 4
    %717 = vrot.lane.b32.xlu0 %v716, 32
    %v718 = vpop.permute.xlu0 %717
    %v719 = vsel %vm161, %v718, 0
    %721 = vmatpush.msra.mxu0 0.0
    %722 = vmatpush.msra.mxu0 0.0
    %723 = vmatpush.msra.mxu0 0.0
    %724 = vmatpush.msra.mxu0 0.0
    %725 = vmatpush.msra.mxu0 0.0
    %726 = vmatpush.msra.mxu0 0.0
    %727 = vmatpush.msra.mxu0 0.0
    %728 = vmatpush.msra.mxu0 0.0
    %729 = vmatpush.msra.mxu0 0.0
    %730 = vmatpush.msra.mxu0 0.0
    %731 = vmatpush.msra.mxu0 0.0
    %732 = vmatpush.msra.mxu0 0.0
    %733 = vmatpush.msra.mxu0 %v194
    %734 = vmatpush.msra.mxu0 %v193
    %735 = vmatpush.msra.mxu0 %v192
    %736 = vmatpush.msra.mxu0 %v191
    %737 = vmatmul.f32.gmra.mxu0 %v719
    %v738 = vpop.f32.mrf.mxu0
    %v739 = vadd.f32 0.0, %v738
    %740 = vdwg.mxu0
    %v742 = vrot.slane %v739, 2
    %v744 = vadd.f32 %v189, %v742
    %v745 = vxor.u32 %v744, 2147483648
    %v746 = vmul.f32 %v745, 1.442695
    %v747 = vpow.pop %v746
    %v748 = vadd.f32 %v747, 1.0
    %v749 = vrcp.pop %v748
    %v750 = vmul.f32 %v748, %v749
    %v751 = vsub.f32 1.0, %v750
    %v752 = vmul.f32 %v749, %v751
    %v753 = vadd.f32 %v749, %v752
    %vm754 = vweird.f32 %v748
    %vm755 = vweird.f32 %v749
    %vm756 = vmor %vm754, %vm755
    %v757 = vsel %vm756, %v749, %v753
    %v758 = vand.u32 2147483647, %v748
    %vm759 = vcmp.eq.f32.partialorder %v758, 8.507059e+37
    %v760 = vand.u32 %v748, 2147483648
    %v761 = vor.u32 1.1754944e-38, %v760
    %v762 = vsel %vm759, %v761, %v757
    %v763 = vmul.f32 1.0, %v762
    %v764 = vtanh.pop %v744
    %v766 = vrot.slane %v703, 6
    %v768 = vmul.f32 %v763, %v766
    %770 = vrot.lane.b32.xlu0 %v764, 64
    %v771 = vpop.permute.xlu0 %770
    %v773 = vmul.f32 %v763, %v771
    %775 = vrot.lane.b32.xlu0 %v773, 32
    %v776 = vpop.permute.xlu0 %775
    %v778 = vadd.f32 %v768, %v776
    %v779 = vtanh.pop %v778
    %781 = vrot.lane.b32.xlu0 %v779, 64
    %v782 = vpop.permute.xlu0 %781
    %v784 = vmul.f32 %v763, %v782
    %786 = vrot.lane.b32.xlu0 %v784, 32
    %v787 = vpop.permute.xlu0 %786
    %789 = vst.msk [vmem:[#allocation3 + $0x1] sm:$0x40] %vm493, %v787
    %790 = vst.msk [vmem:[#allocation3 + $0x8] sm:$0x80] %vm495, %v787
    %vm791 = vcmask 261126
    %792 = vst.msk [vmem:[#allocation13 - $0x6] sm:$0xc0] %vm791, %v787
    %794 = vrot.lane.b32.xlu0 %v778, 96
    %v795 = vpop.permute.xlu0 %794
    %797 = vst.msk [vmem:[#allocation15 - $0x6] sm:$0xc0] %vm791, %v795
    %v798 = vld [vmem:[#allocation3] sm:$0xff]
    %v799 = vld [vmem:[#allocation3 + $0x8] sm:$0xff]
    %v800 = vld [vmem:[%s7] sm:$0xff]
    %v801 = vld [vmem:[%s7 + $0x8] sm:$0xff]
    %v802 = vld [vmem:[%s7 + $0x10] sm:$0xff]
    %v803 = vld [vmem:[%s7 + $0x18] sm:$0xff]
    %v804 = vld [vmem:[%s8] sm:$0x1]
    %v806 = vperm.slane %v804, 0
    %v809 = vsel %vm161, %v798, 0
    %v812 = vsel %vm161, %v799, 0
    %814 = vmatpush.msra.mxu0 0.0
    %815 = vmatpush.msra.mxu0 0.0
    %816 = vmatpush.msra.mxu0 0.0
    %817 = vmatpush.msra.mxu0 0.0
    %818 = vmatpush.msra.mxu0 0.0
    %819 = vmatpush.msra.mxu0 0.0
    %820 = vmatpush.msra.mxu0 0.0
    %821 = vmatpush.msra.mxu0 0.0
    %822 = vmatpush.msra.mxu0 0.0
    %823 = vmatpush.msra.mxu0 0.0
    %824 = vmatpush.msra.mxu0 0.0
    %825 = vmatpush.msra.mxu0 0.0
    %826 = vmatpush.msra.mxu0 %v803
    %827 = vmatpush.msra.mxu0 %v802
    %828 = vmatpush.msra.mxu0 %v801
    %829 = vmatpush.msra.mxu0 %v800
    %830 = vmatmul.f32.gmra.mxu0 %v809
    %v831 = vpop.f32.mrf.mxu0
    %v832 = vadd.f32 %v806, %v831
    %833 = vmatmul.f32.gmra.mxu0 %v812
    %v834 = vpop.f32.mrf.mxu0
    %v835 = vadd.f32 %v806, %v834
    %836 = vdwg.mxu0
    %vm837 = vcmask 130048
    %838 = vst.msk [vmem:[#allocation12] sm:$0xff] %vm837, %v832
    %839 = vst.msk [vmem:[#allocation12 + $0x8] sm:$0xff] %vm837, %v835
    // Predicated region
    $region46: #{tpu_custom_call.1} parent=1 // pred_check
      _
    $region47: #{tpu_custom_call.1} parent=1 // pred_check_branch
      %841 = sbr.rel (0) target = $region49
    $region48: #{tpu_custom_call.1} parent=1 // pred_region
      %843 = vsyncadd [#allocation8], 0
      %s844 = sshll.u32 [#allocation12], 4
      %s845 = int_to_ptr.vmem [resolvable:$true] %s844
      %s846 = sshll.u32 %s9, 4
      %s847 = int_to_ptr.hbm [resolvable:$true] %s846
      %852 = dma.vmem_to_hbm [thread:$0]  %s845, 256, %s847, [#allocation8], 128, 128, 8
    $region49: #{tpu_custom_call.1} parent=1 // pred_fallthru
      _
    // Predicated region
    $region50: #{tpu_custom_call.1} parent=1 // pred_check
      _
    $region51: #{tpu_custom_call.1} parent=1 // pred_check_branch
      %854 = sbr.rel (0) target = $region53
    $region52: #{tpu_custom_call.1} parent=1 // pred_region
      %856 = vsyncadd [#allocation14], 0
      %s858 = sshll.u32 [#allocation13], 4
      %s859 = int_to_ptr.vmem [resolvable:$true] %s858
      %s860 = sshll.u32 %s10, 4
      %s861 = int_to_ptr.hbm [resolvable:$true] %s860
      %863 = dma.vmem_to_hbm [thread:$0]  %s859, 32, %s861, [#allocation14]
    $region53: #{tpu_custom_call.1} parent=1 // pred_fallthru
      _
    // Predicated region
    $region54: #{tpu_custom_call.1} parent=1 // pred_check
      _
    $region55: #{tpu_custom_call.1} parent=1 // pred_check_branch
      %865 = sbr.rel (0) target = $region57
    $region56: #{tpu_custom_call.1} parent=1 // pred_region
      %867 = vsyncadd [#allocation14], 0
      %s869 = sshll.u32 [#allocation15], 4
      %s870 = int_to_ptr.vmem [resolvable:$true] %s869
      %s871 = sshll.u32 %s11, 4
      %s872 = int_to_ptr.hbm [resolvable:$true] %s871
      %874 = dma.vmem_to_hbm [thread:$0]  %s870, 32, %s872, [#allocation14]
    $region57: #{tpu_custom_call.1} parent=1 // pred_fallthru
      _
    // Predicated region
    $region58: #{tpu_custom_call.1} parent=1 // pred_check
      _
    $region59: #{tpu_custom_call.1} parent=1 // pred_check_branch
      %876 = sbr.rel (0) target = $region61
    $region60: #{tpu_custom_call.1} parent=1 // pred_region
      %878 = dma.done [#allocation8], 256
    $region61: #{tpu_custom_call.1} parent=1 // pred_fallthru
      _
    // Predicated region
    $region62: #{tpu_custom_call.1} parent=1 // pred_check
      _
    $region63: #{tpu_custom_call.1} parent=1 // pred_check_branch
      %880 = sbr.rel (0) target = $region65
    $region64: #{tpu_custom_call.1} parent=1 // pred_region
      %882 = dma.done [#allocation14], 32
    $region65: #{tpu_custom_call.1} parent=1 // pred_fallthru
      _
    // Predicated region
    $region66: #{tpu_custom_call.1} parent=1 // pred_check
      _
    $region67: #{tpu_custom_call.1} parent=1 // pred_check_branch
      %884 = sbr.rel (0) target = $region69
    $region68: #{tpu_custom_call.1} parent=1 // pred_region
      %886 = dma.done [#allocation14], 32
    $region69: #{tpu_custom_call.1} parent=1 // pred_fallthru
      _
    %887 = vsyncpa [#allocation7], 1
    %888 = vsyncpa [#allocation10], 1
    %889 = vsyncpa [#allocation8], 1
    %890 = vsyncpa [#allocation14], 1

</llo_original>
